<compile_context>
chip_gen: v5e
topology: v5e:2x2
jax: 0.10.0
libtpu: 0.0.40
codegen_flags: <defaults>
</compile_context>

<pallas_src>
import jax
import jax.numpy as jnp
from jax.experimental import pallas as pl
from jax.experimental.pallas import tpu as pltpu

HIDDEN = 512                       # Conv1 output channels
NOUT = 2                           # Conv2 output channels (domain logits)
H_CHUNK = 128                      # hidden-dim chunk processed per inner step
_SMALL_C = 8                       # below this, Conv1 runs on the VPU, not MXU
_VMEM_BUDGET = 12 * 1024 * 1024    # safe under v5e's 16 MiB scoped default


def _image_da_kernel(x_ref, w1t_ref, w2t_ref, o_ref):
    # x_ref  : (1, C, t_hw)    f32   spatial tile of one image (C on sublanes)
    # w1t_ref: (HIDDEN, C)     bf16  Conv1 weight, transposed (full, reused)
    # w2t_ref: (NOUT, HIDDEN)  bf16  Conv2 weight, transposed (full, reused)
    # o_ref  : (1, NOUT, t_hw) f32   lane-dense logits tile
    x = x_ref[0]                                   # (C, t_hw) f32
    c, t = x.shape
    use_mxu = c >= _SMALL_C
    if use_mxu:
        # Cast to bf16 on the VPU, in-kernel (hidden under the x DMA); f32 acc.
        x_bf = x.astype(jnp.bfloat16)

    acc = None                                     # (NOUT, t) f32
    for ci in range(HIDDEN // H_CHUNK):            # chunk the hidden dim
        lo, hi = ci * H_CHUNK, (ci + 1) * H_CHUNK
        w1c = w1t_ref[lo:hi, :]                    # (H_CHUNK, C) bf16
        if use_mxu:
            h = jnp.dot(w1c, x_bf, preferred_element_type=jnp.float32)
        else:
            # Tiny-K contraction: unrolled VPU broadcast MAC in f32
            # (v5e-safe: no bf16 VPU there; a K<8 MXU pass wastes the array).
            w1f = w1c.astype(jnp.float32)          # (H_CHUNK, C)
            h = w1f[:, 0:1] * x[0:1, :]            # (H_CHUNK, t)
            for k in range(1, c):
                h = h + w1f[:, k:k + 1] * x[k:k + 1, :]
        h = jnp.maximum(h, 0.0)                    # ReLU in f32
        w2c = w2t_ref[:, lo:hi]                    # (NOUT, H_CHUNK) bf16
        part = jnp.dot(w2c, h.astype(jnp.bfloat16),
                       preferred_element_type=jnp.float32)   # (NOUT, t)
        acc = part if acc is None else acc + part
    o_ref[0] = acc.astype(o_ref.dtype)


def _vmem_estimate(t, c):
    """Conservative per-step VMEM footprint (bytes) for tile width t."""
    x_buf = 2 * c * t * 4                     # f32 x tile, double-buffered
    w1_buf = 2 * HIDDEN * c * 2               # bf16 Conv1 weight, double-buffered
    w2_buf = 2 * NOUT * HIDDEN * 2            # bf16 Conv2 weight, double-buffered
    out_buf = 2 * NOUT * t * 4                # f32 output tile, double-buffered
    x_bf16 = c * t * 2                        # in-kernel bf16 copy of x
    h_chunk = H_CHUNK * t * (4 + 2)           # f32 hidden chunk + bf16 recast
    acc = NOUT * t * 4                        # f32 accumulator
    return x_buf + w1_buf + w2_buf + out_buf + x_bf16 + h_chunk + acc


def _choose_tile(hw, c, n):
    """Largest lane-multiple spatial tile that fits the VMEM budget.

    The tile does NOT need to divide H*W: the grid uses ceil-div and the last
    x block reads slightly past the array end (garbage lanes are sliced off
    in the wrapper).  Also guarantees >= 2 grid steps so both v7x TensorCores
    get work."""
    hw_cap = -(-hw // 128) * 128              # lane-aligned cover of H*W
    t_hw = 128
    for t in (2048, 1024, 512, 256, 128):
        if t > hw_cap:
            continue
        if _vmem_estimate(t, c) <= _VMEM_BUDGET:
            t_hw = t
            break
    while t_hw > 128 and n * (-(-hw // t_hw)) < 2:
        t_hw //= 2                            # megacore: give core 1 something
    return t_hw


def _fused_pointwise_convs(x_nc_hw, w1t, w2t, t_hw, hwp):
    """relu(W1^T @ x) then W2^T @ (.) for x of shape (N, C, HW) -> (N, 2, HWp)."""
    N, C, HW = x_nc_hw.shape
    grid_hw = hwp // t_hw
    flops = 2 * N * HW * C * HIDDEN + 2 * N * HW * HIDDEN * NOUT
    bytes_accessed = (N * C * HW * 4 + N * NOUT * hwp * 4
                      + HIDDEN * C * 2 + NOUT * HIDDEN * 2)
    return pl.pallas_call(
        _image_da_kernel,
        out_shape=jax.ShapeDtypeStruct((N, NOUT, hwp), jnp.float32),
        grid_spec=pltpu.PrefetchScalarGridSpec(
            num_scalar_prefetch=0,
            grid=(N, grid_hw),
            in_specs=[
                pl.BlockSpec((1, C, t_hw), lambda n, j: (n, 0, j)),    # x tile
                pl.BlockSpec((HIDDEN, C), lambda n, j: (0, 0)),        # W1^T (full)
                pl.BlockSpec((NOUT, HIDDEN), lambda n, j: (0, 0)),     # W2^T (full)
            ],
            out_specs=pl.BlockSpec((1, NOUT, t_hw), lambda n, j: (n, 0, j)),
        ),
        compiler_params=pltpu.CompilerParams(
            dimension_semantics=("parallel", "parallel")),
        cost_estimate=pl.CostEstimate(
            flops=flops, transcendentals=0, bytes_accessed=bytes_accessed),
    )(x_nc_hw, w1t, w2t)


def image_da_forward(x_nchw, need_backprop, w1, w2):
    """Forward pass of _ImageDA.

    x_nchw:        (N, dim, H, W) float32 feature map
    need_backprop: (N,) float (per-image domain label, 0. or 1.)
    w1:            (dim, 512) == Conv1.weight (512, dim, 1, 1) reshaped (in, out)
    w2:            (512, 2)   == Conv2.weight (2, 512, 1, 1)   reshaped (in, out)
    returns: (logits (N, 2, H, W) float32, label (N, H, W) int32)
    """
    # grad_reverse is identity in the forward pass (GRL only flips gradients).
    N, C, H, W = x_nchw.shape
    HW = H * W
    t_hw = _choose_tile(HW, C, N)
    grid_hw = -(-HW // t_hw)
    HWp = grid_hw * t_hw

    # (N, C, H, W) -> (N, C, H*W): free reshape; x stays f32 in HBM (no extra
    # cast/pad pass — the last spatial block may read past the end, which only
    # pollutes output lanes that are sliced off below).
    x = x_nchw.reshape(N, C, HW)

    # Weight casts are tiny; keep them in the wrapper.
    w1t = jnp.transpose(w1).astype(jnp.bfloat16)   # (512, dim)
    w2t = jnp.transpose(w2).astype(jnp.bfloat16)   # (2, 512)

    out = _fused_pointwise_convs(x, w1t, w2t, t_hw, HWp)   # (N, 2, HWp) f32
    logits = out[:, :, :HW].reshape(N, NOUT, H, W)

    # ImageLabelResizeLayer: nearest-resize of the per-image scalar label to
    # (H, W) == constant plane of need_backprop[i], returned as integer labels.
    label = jnp.broadcast_to(
        need_backprop.astype(jnp.int32)[:, None, None], (N, H, W))
    return logits, label


if __name__ == "__main__":
    key = jax.random.PRNGKey(0)
    k_x, k_w1, k_w2 = jax.random.split(key, 3)

    # Small shapes consistent with the module: batch=2, dim=4, spatial=16x16.
    N, DIM, H, W = 2, 4, 16, 16
    x = jax.random.normal(k_x, (N, DIM, H, W), dtype=jnp.float32)
    need_backprop = jnp.array([1.0, 0.0], dtype=jnp.float32)

    # Deterministic params (nn.Conv2d(dim,512,1,bias=False) / Conv2d(512,2,1)).
    w1 = jax.random.normal(k_w1, (DIM, HIDDEN), dtype=jnp.float32) * 0.05
    w2 = jax.random.normal(k_w2, (HIDDEN, NOUT), dtype=jnp.float32) * 0.05

    logits, label = jax.jit(image_da_forward)(x, need_backprop, w1, w2)
    jax.block_until_ready((logits, label))

    # Reference with the same quantization the kernel applies on this path:
    # x stays f32, weights are bf16-rounded, hidden activation recast to bf16.
    w1q = w1.astype(jnp.bfloat16).astype(jnp.float32)
    w2q = w2.astype(jnp.bfloat16).astype(jnp.float32)
    ref_h = jnp.maximum(
        jnp.einsum("nchw,cd->ndhw", x, w1q,
                   precision=jax.lax.Precision.HIGHEST), 0.0)
    ref_h = ref_h.astype(jnp.bfloat16).astype(jnp.float32)
    ref = jnp.einsum("ndhw,de->nehw", ref_h, w2q,
                     precision=jax.lax.Precision.HIGHEST)

    assert logits.shape == (N, NOUT, H, W) and logits.dtype == jnp.float32
    assert label.shape == (N, H, W) and label.dtype == jnp.int32
    assert jnp.allclose(logits, ref, atol=3e-3, rtol=3e-3), float(
        jnp.max(jnp.abs(logits - ref)))
    assert bool(jnp.all(label[0] == 1)) and bool(jnp.all(label[1] == 0))

    print("KERNEL_OK")
</pallas_src>

<mosaic_0001>
module attributes {stable_mosaic.version = 11 : i64} {
  func.func @_image_da_kernel(%arg0: i32, %arg1: i32, %arg2: memref<1x4x256xf32, #tpu.memory_space<vmem>>, %arg3: memref<512x4xbf16, #tpu.memory_space<vmem>>, %arg4: memref<2x512xbf16, #tpu.memory_space<vmem>>, %arg5: memref<1x2x256xf32, #tpu.memory_space<vmem>>) attributes {dimension_semantics = [#tpu.dimension_semantics<parallel>, #tpu.dimension_semantics<parallel>], iteration_bounds = array<i64: 2, 1>, scalar_prefetch = 0 : i64, scratch_operands = 0 : i64, tpu.core_type = #tpu.core_type<tc>, window_params = [{transform_indices = @transform_0, window_bounds = array<i64: 1, 4, 256>}, {pipeline_mode = #tpu.pipeline_mode<synchronous>, transform_indices = @transform_1, window_bounds = array<i64: 512, 4>}, {pipeline_mode = #tpu.pipeline_mode<synchronous>, transform_indices = @transform_2, window_bounds = array<i64: 2, 512>}, {transform_indices = @transform_3, window_bounds = array<i64: 1, 2, 256>}]} {
    %c0 = arith.constant 0 : index
    %c0_0 = arith.constant 0 : index
    %c0_1 = arith.constant 0 : index
    %0 = vector.load %arg2[%c0, %c0_0, %c0_1] : memref<1x4x256xf32, #tpu.memory_space<vmem>>, vector<1x4x256xf32>
    %1 = vector.shape_cast %0 : vector<1x4x256xf32> to vector<4x256xf32>
    %c0_2 = arith.constant 0 : index
    %c0_3 = arith.constant 0 : index
    %2 = vector.load %arg3[%c0_2, %c0_3] : memref<512x4xbf16, #tpu.memory_space<vmem>>, vector<128x4xbf16>
    %3 = arith.extf %2 : vector<128x4xbf16> to vector<128x4xf32>
    %4 = vector.extract_strided_slice %3 {offsets = [0, 0], sizes = [128, 1], strides = [1, 1]} : vector<128x4xf32> to vector<128x1xf32>
    %5 = vector.extract_strided_slice %1 {offsets = [0, 0], sizes = [1, 256], strides = [1, 1]} : vector<4x256xf32> to vector<1x256xf32>
    %6 = vector.broadcast %4 : vector<128x1xf32> to vector<128x256xf32>
    %7 = vector.broadcast %5 : vector<1x256xf32> to vector<128x256xf32>
    %8 = arith.mulf %6, %7 : vector<128x256xf32>
    %9 = vector.extract_strided_slice %3 {offsets = [0, 1], sizes = [128, 1], strides = [1, 1]} : vector<128x4xf32> to vector<128x1xf32>
    %10 = vector.extract_strided_slice %1 {offsets = [1, 0], sizes = [1, 256], strides = [1, 1]} : vector<4x256xf32> to vector<1x256xf32>
    %11 = vector.broadcast %9 : vector<128x1xf32> to vector<128x256xf32>
    %12 = vector.broadcast %10 : vector<1x256xf32> to vector<128x256xf32>
    %13 = arith.mulf %11, %12 : vector<128x256xf32>
    %14 = arith.addf %8, %13 : vector<128x256xf32>
    %15 = vector.extract_strided_slice %3 {offsets = [0, 2], sizes = [128, 1], strides = [1, 1]} : vector<128x4xf32> to vector<128x1xf32>
    %16 = vector.extract_strided_slice %1 {offsets = [2, 0], sizes = [1, 256], strides = [1, 1]} : vector<4x256xf32> to vector<1x256xf32>
    %17 = vector.broadcast %15 : vector<128x1xf32> to vector<128x256xf32>
    %18 = vector.broadcast %16 : vector<1x256xf32> to vector<128x256xf32>
    %19 = arith.mulf %17, %18 : vector<128x256xf32>
    %20 = arith.addf %14, %19 : vector<128x256xf32>
    %21 = vector.extract_strided_slice %3 {offsets = [0, 3], sizes = [128, 1], strides = [1, 1]} : vector<128x4xf32> to vector<128x1xf32>
    %22 = vector.extract_strided_slice %1 {offsets = [3, 0], sizes = [1, 256], strides = [1, 1]} : vector<4x256xf32> to vector<1x256xf32>
    %23 = vector.broadcast %21 : vector<128x1xf32> to vector<128x256xf32>
    %24 = vector.broadcast %22 : vector<1x256xf32> to vector<128x256xf32>
    %25 = arith.mulf %23, %24 : vector<128x256xf32>
    %26 = arith.addf %20, %25 : vector<128x256xf32>
    %cst = arith.constant 0.000000e+00 : f32
    %27 = vector.broadcast %cst : f32 to vector<128x256xf32>
    %28 = arith.maximumf %26, %27 : vector<128x256xf32>
    %c0_4 = arith.constant 0 : index
    %c0_5 = arith.constant 0 : index
    %29 = vector.load %arg4[%c0_4, %c0_5] : memref<2x512xbf16, #tpu.memory_space<vmem>>, vector<2x128xbf16>
    %30 = arith.truncf %28 : vector<128x256xf32> to vector<128x256xbf16>
    %cst_6 = arith.constant dense<0.000000e+00> : vector<2x256xf32>
    %31 = tpu.matmul %29, %30, %cst_6 {dimension_numbers = #tpu.dot_dimension_numbers<[1], [0], [0], [1], [0, 0, 1, 1], [], []>} : vector<2x128xbf16>, vector<128x256xbf16>, vector<2x256xf32> -> vector<2x256xf32>
    %c128 = arith.constant 128 : index
    %c0_7 = arith.constant 0 : index
    %32 = vector.load %arg3[%c128, %c0_7] : memref<512x4xbf16, #tpu.memory_space<vmem>>, vector<128x4xbf16>
    %33 = arith.extf %32 : vector<128x4xbf16> to vector<128x4xf32>
    %34 = vector.extract_strided_slice %33 {offsets = [0, 0], sizes = [128, 1], strides = [1, 1]} : vector<128x4xf32> to vector<128x1xf32>
    %35 = vector.extract_strided_slice %1 {offsets = [0, 0], sizes = [1, 256], strides = [1, 1]} : vector<4x256xf32> to vector<1x256xf32>
    %36 = vector.broadcast %34 : vector<128x1xf32> to vector<128x256xf32>
    %37 = vector.broadcast %35 : vector<1x256xf32> to vector<128x256xf32>
    %38 = arith.mulf %36, %37 : vector<128x256xf32>
    %39 = vector.extract_strided_slice %33 {offsets = [0, 1], sizes = [128, 1], strides = [1, 1]} : vector<128x4xf32> to vector<128x1xf32>
    %40 = vector.extract_strided_slice %1 {offsets = [1, 0], sizes = [1, 256], strides = [1, 1]} : vector<4x256xf32> to vector<1x256xf32>
    %41 = vector.broadcast %39 : vector<128x1xf32> to vector<128x256xf32>
    %42 = vector.broadcast %40 : vector<1x256xf32> to vector<128x256xf32>
    %43 = arith.mulf %41, %42 : vector<128x256xf32>
    %44 = arith.addf %38, %43 : vector<128x256xf32>
    %45 = vector.extract_strided_slice %33 {offsets = [0, 2], sizes = [128, 1], strides = [1, 1]} : vector<128x4xf32> to vector<128x1xf32>
    %46 = vector.extract_strided_slice %1 {offsets = [2, 0], sizes = [1, 256], strides = [1, 1]} : vector<4x256xf32> to vector<1x256xf32>
    %47 = vector.broadcast %45 : vector<128x1xf32> to vector<128x256xf32>
    %48 = vector.broadcast %46 : vector<1x256xf32> to vector<128x256xf32>
    %49 = arith.mulf %47, %48 : vector<128x256xf32>
    %50 = arith.addf %44, %49 : vector<128x256xf32>
    %51 = vector.extract_strided_slice %33 {offsets = [0, 3], sizes = [128, 1], strides = [1, 1]} : vector<128x4xf32> to vector<128x1xf32>
    %52 = vector.extract_strided_slice %1 {offsets = [3, 0], sizes = [1, 256], strides = [1, 1]} : vector<4x256xf32> to vector<1x256xf32>
    %53 = vector.broadcast %51 : vector<128x1xf32> to vector<128x256xf32>
    %54 = vector.broadcast %52 : vector<1x256xf32> to vector<128x256xf32>
    %55 = arith.mulf %53, %54 : vector<128x256xf32>
    %56 = arith.addf %50, %55 : vector<128x256xf32>
    %cst_8 = arith.constant 0.000000e+00 : f32
    %57 = vector.broadcast %cst_8 : f32 to vector<128x256xf32>
    %58 = arith.maximumf %56, %57 : vector<128x256xf32>
    %c0_9 = arith.constant 0 : index
    %c128_10 = arith.constant 128 : index
    %59 = vector.load %arg4[%c0_9, %c128_10] : memref<2x512xbf16, #tpu.memory_space<vmem>>, vector<2x128xbf16>
    %60 = arith.truncf %58 : vector<128x256xf32> to vector<128x256xbf16>
    %cst_11 = arith.constant dense<0.000000e+00> : vector<2x256xf32>
    %61 = tpu.matmul %59, %60, %cst_11 {dimension_numbers = #tpu.dot_dimension_numbers<[1], [0], [0], [1], [0, 0, 1, 1], [], []>} : vector<2x128xbf16>, vector<128x256xbf16>, vector<2x256xf32> -> vector<2x256xf32>
    %62 = arith.addf %31, %61 : vector<2x256xf32>
    %c256 = arith.constant 256 : index
    %c0_12 = arith.constant 0 : index
    %63 = vector.load %arg3[%c256, %c0_12] : memref<512x4xbf16, #tpu.memory_space<vmem>>, vector<128x4xbf16>
    %64 = arith.extf %63 : vector<128x4xbf16> to vector<128x4xf32>
    %65 = vector.extract_strided_slice %64 {offsets = [0, 0], sizes = [128, 1], strides = [1, 1]} : vector<128x4xf32> to vector<128x1xf32>
    %66 = vector.extract_strided_slice %1 {offsets = [0, 0], sizes = [1, 256], strides = [1, 1]} : vector<4x256xf32> to vector<1x256xf32>
    %67 = vector.broadcast %65 : vector<128x1xf32> to vector<128x256xf32>
    %68 = vector.broadcast %66 : vector<1x256xf32> to vector<128x256xf32>
    %69 = arith.mulf %67, %68 : vector<128x256xf32>
    %70 = vector.extract_strided_slice %64 {offsets = [0, 1], sizes = [128, 1], strides = [1, 1]} : vector<128x4xf32> to vector<128x1xf32>
    %71 = vector.extract_strided_slice %1 {offsets = [1, 0], sizes = [1, 256], strides = [1, 1]} : vector<4x256xf32> to vector<1x256xf32>
    %72 = vector.broadcast %70 : vector<128x1xf32> to vector<128x256xf32>
    %73 = vector.broadcast %71 : vector<1x256xf32> to vector<128x256xf32>
    %74 = arith.mulf %72, %73 : vector<128x256xf32>
    %75 = arith.addf %69, %74 : vector<128x256xf32>
    %76 = vector.extract_strided_slice %64 {offsets = [0, 2], sizes = [128, 1], strides = [1, 1]} : vector<128x4xf32> to vector<128x1xf32>
    %77 = vector.extract_strided_slice %1 {offsets = [2, 0], sizes = [1, 256], strides = [1, 1]} : vector<4x256xf32> to vector<1x256xf32>
    %78 = vector.broadcast %76 : vector<128x1xf32> to vector<128x256xf32>
    %79 = vector.broadcast %77 : vector<1x256xf32> to vector<128x256xf32>
    %80 = arith.mulf %78, %79 : vector<128x256xf32>
    %81 = arith.addf %75, %80 : vector<128x256xf32>
    %82 = vector.extract_strided_slice %64 {offsets = [0, 3], sizes = [128, 1], strides = [1, 1]} : vector<128x4xf32> to vector<128x1xf32>
    %83 = vector.extract_strided_slice %1 {offsets = [3, 0], sizes = [1, 256], strides = [1, 1]} : vector<4x256xf32> to vector<1x256xf32>
    %84 = vector.broadcast %82 : vector<128x1xf32> to vector<128x256xf32>
    %85 = vector.broadcast %83 : vector<1x256xf32> to vector<128x256xf32>
    %86 = arith.mulf %84, %85 : vector<128x256xf32>
    %87 = arith.addf %81, %86 : vector<128x256xf32>
    %cst_13 = arith.constant 0.000000e+00 : f32
    %88 = vector.broadcast %cst_13 : f32 to vector<128x256xf32>
    %89 = arith.maximumf %87, %88 : vector<128x256xf32>
    %c0_14 = arith.constant 0 : index
    %c256_15 = arith.constant 256 : index
    %90 = vector.load %arg4[%c0_14, %c256_15] : memref<2x512xbf16, #tpu.memory_space<vmem>>, vector<2x128xbf16>
    %91 = arith.truncf %89 : vector<128x256xf32> to vector<128x256xbf16>
    %cst_16 = arith.constant dense<0.000000e+00> : vector<2x256xf32>
    %92 = tpu.matmul %90, %91, %cst_16 {dimension_numbers = #tpu.dot_dimension_numbers<[1], [0], [0], [1], [0, 0, 1, 1], [], []>} : vector<2x128xbf16>, vector<128x256xbf16>, vector<2x256xf32> -> vector<2x256xf32>
    %93 = arith.addf %62, %92 : vector<2x256xf32>
    %c384 = arith.constant 384 : index
    %c0_17 = arith.constant 0 : index
    %94 = vector.load %arg3[%c384, %c0_17] : memref<512x4xbf16, #tpu.memory_space<vmem>>, vector<128x4xbf16>
    %95 = arith.extf %94 : vector<128x4xbf16> to vector<128x4xf32>
    %96 = vector.extract_strided_slice %95 {offsets = [0, 0], sizes = [128, 1], strides = [1, 1]} : vector<128x4xf32> to vector<128x1xf32>
    %97 = vector.extract_strided_slice %1 {offsets = [0, 0], sizes = [1, 256], strides = [1, 1]} : vector<4x256xf32> to vector<1x256xf32>
    %98 = vector.broadcast %96 : vector<128x1xf32> to vector<128x256xf32>
    %99 = vector.broadcast %97 : vector<1x256xf32> to vector<128x256xf32>
    %100 = arith.mulf %98, %99 : vector<128x256xf32>
    %101 = vector.extract_strided_slice %95 {offsets = [0, 1], sizes = [128, 1], strides = [1, 1]} : vector<128x4xf32> to vector<128x1xf32>
    %102 = vector.extract_strided_slice %1 {offsets = [1, 0], sizes = [1, 256], strides = [1, 1]} : vector<4x256xf32> to vector<1x256xf32>
    %103 = vector.broadcast %101 : vector<128x1xf32> to vector<128x256xf32>
    %104 = vector.broadcast %102 : vector<1x256xf32> to vector<128x256xf32>
    %105 = arith.mulf %103, %104 : vector<128x256xf32>
    %106 = arith.addf %100, %105 : vector<128x256xf32>
    %107 = vector.extract_strided_slice %95 {offsets = [0, 2], sizes = [128, 1], strides = [1, 1]} : vector<128x4xf32> to vector<128x1xf32>
    %108 = vector.extract_strided_slice %1 {offsets = [2, 0], sizes = [1, 256], strides = [1, 1]} : vector<4x256xf32> to vector<1x256xf32>
    %109 = vector.broadcast %107 : vector<128x1xf32> to vector<128x256xf32>
    %110 = vector.broadcast %108 : vector<1x256xf32> to vector<128x256xf32>
    %111 = arith.mulf %109, %110 : vector<128x256xf32>
    %112 = arith.addf %106, %111 : vector<128x256xf32>
    %113 = vector.extract_strided_slice %95 {offsets = [0, 3], sizes = [128, 1], strides = [1, 1]} : vector<128x4xf32> to vector<128x1xf32>
    %114 = vector.extract_strided_slice %1 {offsets = [3, 0], sizes = [1, 256], strides = [1, 1]} : vector<4x256xf32> to vector<1x256xf32>
    %115 = vector.broadcast %113 : vector<128x1xf32> to vector<128x256xf32>
    %116 = vector.broadcast %114 : vector<1x256xf32> to vector<128x256xf32>
    %117 = arith.mulf %115, %116 : vector<128x256xf32>
    %118 = arith.addf %112, %117 : vector<128x256xf32>
    %cst_18 = arith.constant 0.000000e+00 : f32
    %119 = vector.broadcast %cst_18 : f32 to vector<128x256xf32>
    %120 = arith.maximumf %118, %119 : vector<128x256xf32>
    %c0_19 = arith.constant 0 : index
    %c384_20 = arith.constant 384 : index
    %121 = vector.load %arg4[%c0_19, %c384_20] : memref<2x512xbf16, #tpu.memory_space<vmem>>, vector<2x128xbf16>
    %122 = arith.truncf %120 : vector<128x256xf32> to vector<128x256xbf16>
    %cst_21 = arith.constant dense<0.000000e+00> : vector<2x256xf32>
    %123 = tpu.matmul %121, %122, %cst_21 {dimension_numbers = #tpu.dot_dimension_numbers<[1], [0], [0], [1], [0, 0, 1, 1], [], []>} : vector<2x128xbf16>, vector<128x256xbf16>, vector<2x256xf32> -> vector<2x256xf32>
    %124 = arith.addf %93, %123 : vector<2x256xf32>
    %c0_22 = arith.constant 0 : index
    %c0_23 = arith.constant 0 : index
    %c0_24 = arith.constant 0 : index
    %125 = vector.load %arg5[%c0_22, %c0_23, %c0_24] : memref<1x2x256xf32, #tpu.memory_space<vmem>>, vector<1x2x256xf32>
    %126 = vector.shape_cast %125 : vector<1x2x256xf32> to vector<2x256xf32>
    %127 = vector.shape_cast %124 : vector<2x256xf32> to vector<1x2x256xf32>
    tpu.vector_store %arg5[%c0_22, %c0_23, %c0_24], %127 {strides = array<i32>} : memref<1x2x256xf32, #tpu.memory_space<vmem>>, vector<1x2x256xf32>,
    return
  }
  func.func @transform_0(%arg0: i32, %arg1: i32) -> (i32, i32, i32) {
    %c0_i32 = arith.constant 0 : i32
    %c0_i32_0 = arith.constant 0 : i32
    return %arg0, %c0_i32, %arg1 : i32, i32, i32
  }
  func.func @transform_1(%arg0: i32, %arg1: i32) -> (i32, i32) {
    %c0_i32 = arith.constant 0 : i32
    %c0_i32_0 = arith.constant 0 : i32
    %c0_i32_1 = arith.constant 0 : i32
    return %c0_i32, %c0_i32_0 : i32, i32
  }
  func.func @transform_2(%arg0: i32, %arg1: i32) -> (i32, i32) {
    %c0_i32 = arith.constant 0 : i32
    %c0_i32_0 = arith.constant 0 : i32
    %c0_i32_1 = arith.constant 0 : i32
    return %c0_i32, %c0_i32_0 : i32, i32
  }
  func.func @transform_3(%arg0: i32, %arg1: i32) -> (i32, i32, i32) {
    %c0_i32 = arith.constant 0 : i32
    %c0_i32_0 = arith.constant 0 : i32
    return %arg0, %c0_i32, %arg1 : i32, i32, i32
  }
}

</mosaic_0001>

<llo_original>
// kernel: image_da_forward.1
$region0: #{image_da_forward.1}
  #allocation0 [shape = 'u32[]', space=smem, size = 0x4, offset = 0x4, fixed_abs, tag = 'smem constant byte address 0x4 - core index']
  #allocation1 [shape = 'u32[72,128]{1,0:T(1,128)}', space=vmem, size = 0x9000, scoped, tag = 'internal scratch']
  %s0 = inlined_call_operand.vmem [shape: f32[2,4,256], index: 0, kind: input, shape index: {}]
  %s1 = inlined_call_operand.vmem [shape: bf16[512,4], index: 1, kind: input, shape index: {}]
  %s2 = inlined_call_operand.vmem [shape: bf16[2,512], index: 2, kind: input, shape index: {}]
  %s3 = inlined_call_operand.vmem [shape: f32[2,2,256], index: 3, kind: output, shape index: {}]
  %s4 = sld [smem:[#allocation0]]
  $region45: #{image_da_forward.1} parent=0
    _
  %s6 = ssub.s32 1, %s4
  %s7 = scalar_select 0, %s6, %s4
  loop: start=0, step=1, limit=4
  $region2: #{image_da_forward.1} parent=0 // loop_pre_header
    _
  $region3: #{image_da_forward.1} parent=0 // loop_header
    %s9 = sphi 0, %s13
    %p10 = scmp.ge.s32.totalorder %s9, 4
    %s16 = sphi 0, %s28
    %s17 = sphi 0, %s24
    %s18 = sphi 0, %s16
    %s19 = sphi 0, %s17
    %s20 = sphi 0, %s18
    %s21 = sphi 0, %s19
    %s33 = sphi 0, %s35
    %s36 = sphi 0, %s33
    %s37 = sphi 0, %s36
    %s53 = sphi 0, %s37
    %s57 = sphi 0, %s57
    %s59 = sphi 0, %s57
    %s60 = sphi 0, %s59
    %s74 = sphi 0, %s60
    %s78 = sphi 0, %s78
    %s80 = sphi 0, %s78
    %s81 = sphi 0, %s80
    %s95 = sphi 0, %s81
    %s103 = sphi 0, %s105
    %s106 = sphi 0, %s103
    %s107 = sphi 0, %s106
    %s123 = sphi 0, %s107
  $region4: #{image_da_forward.1} parent=0 // loop_header_branch
    %12 = sbr.rel (%p10) target = $region8
  $region5: #{image_da_forward.1} parent=0 // loop_body
    %s14 = ssub.s32 %s9, 1
    %s15 = ssub.s32 %s9, 2
    %s22 = sadd.s32 1, %s17
    %p23 = scmp.ge.s32.totalorder %s22, 1
    %s24 = scalar_select %p23, 0, %s22
    %s25 = sadd.s32 1, %s16
    %s26 = scalar_select %p23, %s25, %s16
    %p27 = scmp.ge.s32.totalorder %s26, 2
    %s28 = scalar_select %p27, 0, %s26
    %s29 = ssub.s32 %s16, %s28
    %s30 = ssub.s32 %s17, %s24
    %s31 = sor.u32 %s29, %s30
    %p32 = scmp.eq.s32.totalorder %s31, 0
    %s34 = sadd.s32 %s33, 1
    %s35 = scalar_select %p32, %s33, %s34
    %p38 = pneg %p32
    %p39 = scmp.eq.s32.totalorder %s9, 1
    %p40 = por %p38, %p39
    %p41 = scmp.ne.s32.totalorder %s33, %s36
    %p42 = scmp.eq.s32.totalorder %s9, 0
    %p43 = por %p41, %p42
    %p44 = scmp.ne.s32.totalorder %s33, %s36
    %p45 = scmp.eq.s32.totalorder %s14, 1
    %p46 = por %p44, %p45
    %p47 = scmp.ne.s32.totalorder %s36, %s37
    %p48 = scmp.eq.s32.totalorder %s14, 0
    %p49 = por %p47, %p48
    %p50 = scmp.ne.s32.totalorder %s36, %s37
    %p51 = scmp.eq.s32.totalorder %s15, 1
    %p52 = por %p50, %p51
    %p54 = scmp.ne.s32.totalorder %s37, %s53
    %p55 = scmp.eq.s32.totalorder %s15, 0
    %p56 = por %p54, %p55
    %s58 = sadd.s32 %s57, 1
    %p61 = scmp.eq.s32.totalorder %s9, 1
    %p62 = scmp.ne.s32.totalorder %s57, %s59
    %p63 = scmp.eq.s32.totalorder %s9, 0
    %p64 = por %p62, %p63
    %p65 = scmp.ne.s32.totalorder %s57, %s59
    %p66 = scmp.eq.s32.totalorder %s14, 1
    %p67 = por %p65, %p66
    %p68 = scmp.ne.s32.totalorder %s59, %s60
    %p69 = scmp.eq.s32.totalorder %s14, 0
    %p70 = por %p68, %p69
    %p71 = scmp.ne.s32.totalorder %s59, %s60
    %p72 = scmp.eq.s32.totalorder %s15, 1
    %p73 = por %p71, %p72
    %p75 = scmp.ne.s32.totalorder %s60, %s74
    %p76 = scmp.eq.s32.totalorder %s15, 0
    %p77 = por %p75, %p76
    %s79 = sadd.s32 %s78, 1
    %p82 = scmp.eq.s32.totalorder %s9, 1
    %p83 = scmp.ne.s32.totalorder %s78, %s80
    %p84 = scmp.eq.s32.totalorder %s9, 0
    %p85 = por %p83, %p84
    %p86 = scmp.ne.s32.totalorder %s78, %s80
    %p87 = scmp.eq.s32.totalorder %s14, 1
    %p88 = por %p86, %p87
    %p89 = scmp.ne.s32.totalorder %s80, %s81
    %p90 = scmp.eq.s32.totalorder %s14, 0
    %p91 = por %p89, %p90
    %p92 = scmp.ne.s32.totalorder %s80, %s81
    %p93 = scmp.eq.s32.totalorder %s15, 1
    %p94 = por %p92, %p93
    %p96 = scmp.ne.s32.totalorder %s81, %s95
    %p97 = scmp.eq.s32.totalorder %s15, 0
    %p98 = por %p96, %p97
    %s99 = ssub.s32 %s16, %s28
    %s100 = ssub.s32 %s17, %s24
    %s101 = sor.u32 %s99, %s100
    %p102 = scmp.eq.s32.totalorder %s101, 0
    %s104 = sadd.s32 %s103, 1
    %s105 = scalar_select %p102, %s103, %s104
    %p108 = pneg %p102
    %p109 = scmp.eq.s32.totalorder %s9, 1
    %p110 = por %p108, %p109
    %p111 = scmp.ne.s32.totalorder %s103, %s106
    %p112 = scmp.eq.s32.totalorder %s9, 0
    %p113 = por %p111, %p112
    %p114 = scmp.ne.s32.totalorder %s103, %s106
    %p115 = scmp.eq.s32.totalorder %s14, 1
    %p116 = por %p114, %p115
    %p117 = scmp.ne.s32.totalorder %s106, %s107
    %p118 = scmp.eq.s32.totalorder %s14, 0
    %p119 = por %p117, %p118
    %p120 = scmp.ne.s32.totalorder %s106, %s107
    %p121 = scmp.eq.s32.totalorder %s15, 1
    %p122 = por %p120, %p121
    %p124 = scmp.ne.s32.totalorder %s107, %s123
    %p125 = scmp.eq.s32.totalorder %s15, 0
    %p126 = por %p124, %p125
    %p127 = scmp.le.s32.totalorder 1, %s9
    %p128 = scmp.lt.s32.totalorder %s9, 3
    %p129 = pnand %p127, %p128
    %p130 = pneg %p129
    // Predicated region
    $region9: #{image_da_forward.1} parent=5 // pred_check
      _
    $region10: #{image_da_forward.1} parent=5 // pred_check_branch
      %132 = sbr.rel (%p129) target = $region12
    $region11: #{image_da_forward.1} parent=5 // pred_region
      %s133 = ssub.s32 %s9, 1
      // Predicated region
      $region13: #{image_da_forward.1} parent=11 // pred_check
        %p134 = pneg %p70
      $region14: #{image_da_forward.1} parent=11 // pred_check_branch
        %136 = sbr.rel (%p134) target = $region16
      $region15: #{image_da_forward.1} parent=11 // pred_region
        _
      $region16: #{image_da_forward.1} parent=11 // pred_fallthru
        _
      // Predicated region
      $region17: #{image_da_forward.1} parent=11 // pred_check
        %p137 = pneg %p91
      $region18: #{image_da_forward.1} parent=11 // pred_check_branch
        %139 = sbr.rel (%p137) target = $region20
      $region19: #{image_da_forward.1} parent=11 // pred_region
        _
      $region20: #{image_da_forward.1} parent=11 // pred_fallthru
        _
    $region12: #{image_da_forward.1} parent=5 // pred_fallthru
      _
    %p140 = scmp.lt.s32.totalorder %s9, 2
    // Predicated region
    $region21: #{image_da_forward.1} parent=5 // pred_check
      %p141 = pneg %p140
    $region22: #{image_da_forward.1} parent=5 // pred_check_branch
      %143 = sbr.rel (%p141) target = $region24
    $region23: #{image_da_forward.1} parent=5 // pred_region
      // Predicated region
      $region25: #{image_da_forward.1} parent=23 // pred_check
        %p144 = pneg %p43
      $region26: #{image_da_forward.1} parent=23 // pred_check_branch
        %146 = sbr.rel (%p144) target = $region28
      $region27: #{image_da_forward.1} parent=23 // pred_region
        %s147 = smul.u32 2, %s17
        %p148 = scmp.lt.s32.totalorder %s16, 1
        %s149 = scalar_select %p148, %s16, 1
        %p150 = scmp.lt.s32.totalorder %s147, 1
        %s151 = scalar_select %p150, %s147, 1
        %s152 = smul.addr %s149, 2
        %s153 = sadd.s32 %s151, %s152
        %s154 = smul.addr %s153, 4
        %s155 = scalar_lea.vmem %s0, %s154
        %s156 = smul.u32 2, %s17
      $region28: #{image_da_forward.1} parent=23 // pred_fallthru
        _
    $region24: #{image_da_forward.1} parent=5 // pred_fallthru
      _
    %p157 = scmp.le.s32.totalorder 1, %s9
    %p158 = scmp.lt.s32.totalorder %s9, 3
    %p159 = pnand %p157, %p158
    %p160 = pneg %p159
    // Predicated region
    $region29: #{image_da_forward.1} parent=5 // pred_check
      _
    $region30: #{image_da_forward.1} parent=5 // pred_check_branch
      %162 = sbr.rel (%p159) target = $region32
    $region31: #{image_da_forward.1} parent=5 // pred_region
      %s163 = ssub.s32 %s9, 1
      %s164 = smul.u32 2, %s19
      %p165 = scmp.lt.s32.totalorder %s18, 1
      %s166 = scalar_select %p165, %s18, 1
      %p167 = scmp.lt.s32.totalorder %s164, 1
      %s168 = scalar_select %p167, %s164, 1
      %s169 = smul.addr %s166, 2
      %s170 = sadd.s32 %s168, %s169
      %s171 = smul.addr %s170, 4
      %s172 = scalar_lea.vmem %s0, %s171
      %p173 = pneg %p49
      %p174 = pneg %p46
      %p175 = pneg %p70
      %p176 = pneg %p67
      %p177 = pneg %p91
      %p178 = pneg %p88
      %p179 = pneg %p119
      %p180 = pneg %p116
      %s181 = smul.u32 2, %s19
      %p182 = scmp.lt.s32.totalorder %s18, 1
      %s183 = scalar_select %p182, %s18, 1
      %p184 = scmp.lt.s32.totalorder %s181, 1
      %s185 = scalar_select %p184, %s181, 1
      %s186 = smul.addr %s183, 2
      %s187 = sadd.s32 %s185, %s186
      %s188 = smul.addr %s187, 2
      %s189 = scalar_lea.vmem %s3, %s188
      %s190 = smul.u32 2, %s19
      %p191 = scmp.lt.s32.totalorder %s18, 1
      %s192 = scalar_select %p191, %s18, 1
      %p193 = scmp.lt.s32.totalorder %s190, 1
      %s194 = scalar_select %p193, %s190, 1
      %s195 = smul.addr %s192, 2
      %s196 = sadd.s32 %s194, %s195
      %s197 = smul.addr %s196, 4
      %s198 = scalar_lea.vmem %s0, %s197
      %s199 = smul.u32 2, %s19
      %s200 = smul.u32 2, %s19
      %p201 = scmp.lt.s32.totalorder %s18, 1
      %s202 = scalar_select %p201, %s18, 1
      %p203 = scmp.lt.s32.totalorder %s200, 1
      %s204 = scalar_select %p203, %s200, 1
      %s205 = smul.addr %s202, 2
      %s206 = sadd.s32 %s204, %s205
      %s207 = smul.addr %s206, 2
      %s208 = scalar_lea.vmem %s3, %s207
      %s209 = smul.u32 2, %s19
      %v210 = vld [vmem:[%s198] sm:$0xff]
      %v211 = vld [vmem:[%s1] sm:$0xf]
      %v212 = vld [vmem:[%s1 + $0x4] sm:$0xf]
      %v213 = vld [vmem:[%s1 + $0x8] sm:$0xf]
      %v214 = vld [vmem:[%s1 + $0xc] sm:$0xf]
      %v215 = vld [vmem:[%s1 + $0x10] sm:$0xf]
      %v216 = vld [vmem:[%s1 + $0x14] sm:$0xf]
      %v217 = vld [vmem:[%s1 + $0x18] sm:$0xf]
      %v218 = vld [vmem:[%s1 + $0x1c] sm:$0xf]
      %v219 = vld [vmem:[%s1 + $0x20] sm:$0xf]
      %v220 = vld [vmem:[%s1 + $0x24] sm:$0xf]
      %v221 = vld [vmem:[%s1 + $0x28] sm:$0xf]
      %v222 = vld [vmem:[%s1 + $0x2c] sm:$0xf]
      %v223 = vld [vmem:[%s1 + $0x30] sm:$0xf]
      %v224 = vld [vmem:[%s1 + $0x34] sm:$0xf]
      %v225 = vld [vmem:[%s1 + $0x38] sm:$0xf]
      %v226 = vld [vmem:[%s1 + $0x3c] sm:$0xf]
      %v227 = vunpack.c.l.bf16 %v211
      %v228 = vunpack.c.l.bf16 %v212
      %v229 = vunpack.c.l.bf16 %v213
      %v230 = vunpack.c.l.bf16 %v214
      %v231 = vunpack.c.l.bf16 %v215
      %v232 = vunpack.c.l.bf16 %v216
      %v233 = vunpack.c.l.bf16 %v217
      %v234 = vunpack.c.l.bf16 %v218
      %v235 = vunpack.c.l.bf16 %v219
      %v236 = vunpack.c.l.bf16 %v220
      %v237 = vunpack.c.l.bf16 %v221
      %v238 = vunpack.c.l.bf16 %v222
      %v239 = vunpack.c.l.bf16 %v223
      %v240 = vunpack.c.l.bf16 %v224
      %v241 = vunpack.c.l.bf16 %v225
      %v242 = vunpack.c.l.bf16 %v226
      %244 = vset.pattern.permute.xlu0 0
      %245 = vperm.xlu0 %244, %v227
      %v246 = vpop.permute.xlu0 %245
      %249 = vset.pattern.permute.xlu0 0
      %250 = vperm.xlu0 %249, %v228
      %v251 = vpop.permute.xlu0 %250
      %254 = vset.pattern.permute.xlu0 0
      %255 = vperm.xlu0 %254, %v229
      %v256 = vpop.permute.xlu0 %255
      %259 = vset.pattern.permute.xlu0 0
      %260 = vperm.xlu0 %259, %v230
      %v261 = vpop.permute.xlu0 %260
      %264 = vset.pattern.permute.xlu0 0
      %265 = vperm.xlu0 %264, %v231
      %v266 = vpop.permute.xlu0 %265
      %269 = vset.pattern.permute.xlu0 0
      %270 = vperm.xlu0 %269, %v232
      %v271 = vpop.permute.xlu0 %270
      %274 = vset.pattern.permute.xlu0 0
      %275 = vperm.xlu0 %274, %v233
      %v276 = vpop.permute.xlu0 %275
      %279 = vset.pattern.permute.xlu0 0
      %280 = vperm.xlu0 %279, %v234
      %v281 = vpop.permute.xlu0 %280
      %284 = vset.pattern.permute.xlu0 0
      %285 = vperm.xlu0 %284, %v235
      %v286 = vpop.permute.xlu0 %285
      %289 = vset.pattern.permute.xlu0 0
      %290 = vperm.xlu0 %289, %v236
      %v291 = vpop.permute.xlu0 %290
      %294 = vset.pattern.permute.xlu0 0
      %295 = vperm.xlu0 %294, %v237
      %v296 = vpop.permute.xlu0 %295
      %299 = vset.pattern.permute.xlu0 0
      %300 = vperm.xlu0 %299, %v238
      %v301 = vpop.permute.xlu0 %300
      %304 = vset.pattern.permute.xlu0 0
      %305 = vperm.xlu0 %304, %v239
      %v306 = vpop.permute.xlu0 %305
      %309 = vset.pattern.permute.xlu0 0
      %310 = vperm.xlu0 %309, %v240
      %v311 = vpop.permute.xlu0 %310
      %314 = vset.pattern.permute.xlu0 0
      %315 = vperm.xlu0 %314, %v241
      %v316 = vpop.permute.xlu0 %315
      %319 = vset.pattern.permute.xlu0 0
      %320 = vperm.xlu0 %319, %v242
      %v321 = vpop.permute.xlu0 %320
      %v324 = vperm.slane %v210, 0
      %v325 = vperm.slane %v210, 4
      %v328 = vperm.slane %v324, 0
      %v329 = vperm.slane %v325, 0
      %v330 = vmul.f32 %v246, %v328
      %v331 = vmul.f32 %v246, %v329
      %v332 = vmul.f32 %v251, %v328
      %v333 = vmul.f32 %v251, %v329
      %v334 = vmul.f32 %v256, %v328
      %v335 = vmul.f32 %v256, %v329
      %v336 = vmul.f32 %v261, %v328
      %v337 = vmul.f32 %v261, %v329
      %v338 = vmul.f32 %v266, %v328
      %v339 = vmul.f32 %v266, %v329
      %v340 = vmul.f32 %v271, %v328
      %v341 = vmul.f32 %v271, %v329
      %v342 = vmul.f32 %v276, %v328
      %v343 = vmul.f32 %v276, %v329
      %v344 = vmul.f32 %v281, %v328
      %v345 = vmul.f32 %v281, %v329
      %v346 = vmul.f32 %v286, %v328
      %v347 = vmul.f32 %v286, %v329
      %v348 = vmul.f32 %v291, %v328
      %v349 = vmul.f32 %v291, %v329
      %v350 = vmul.f32 %v296, %v328
      %v351 = vmul.f32 %v296, %v329
      %v352 = vmul.f32 %v301, %v328
      %v353 = vmul.f32 %v301, %v329
      %v354 = vmul.f32 %v306, %v328
      %v355 = vmul.f32 %v306, %v329
      %v356 = vmul.f32 %v311, %v328
      %v357 = vmul.f32 %v311, %v329
      %v358 = vmul.f32 %v316, %v328
      %v359 = vmul.f32 %v316, %v329
      %v360 = vmul.f32 %v321, %v328
      %v361 = vmul.f32 %v321, %v329
      %362 = vset.pattern.permute.xlu0 1
      %363 = vperm.xlu0 %362, %v227
      %v364 = vpop.permute.xlu0 %363
      %366 = vset.pattern.permute.xlu0 1
      %367 = vperm.xlu0 %366, %v228
      %v368 = vpop.permute.xlu0 %367
      %370 = vset.pattern.permute.xlu0 1
      %371 = vperm.xlu0 %370, %v229
      %v372 = vpop.permute.xlu0 %371
      %374 = vset.pattern.permute.xlu0 1
      %375 = vperm.xlu0 %374, %v230
      %v376 = vpop.permute.xlu0 %375
      %378 = vset.pattern.permute.xlu0 1
      %379 = vperm.xlu0 %378, %v231
      %v380 = vpop.permute.xlu0 %379
      %382 = vset.pattern.permute.xlu0 1
      %383 = vperm.xlu0 %382, %v232
      %v384 = vpop.permute.xlu0 %383
      %386 = vset.pattern.permute.xlu0 1
      %387 = vperm.xlu0 %386, %v233
      %v388 = vpop.permute.xlu0 %387
      %390 = vset.pattern.permute.xlu0 1
      %391 = vperm.xlu0 %390, %v234
      %v392 = vpop.permute.xlu0 %391
      %394 = vset.pattern.permute.xlu0 1
      %395 = vperm.xlu0 %394, %v235
      %v396 = vpop.permute.xlu0 %395
      %398 = vset.pattern.permute.xlu0 1
      %399 = vperm.xlu0 %398, %v236
      %v400 = vpop.permute.xlu0 %399
      %402 = vset.pattern.permute.xlu0 1
      %403 = vperm.xlu0 %402, %v237
      %v404 = vpop.permute.xlu0 %403
      %406 = vset.pattern.permute.xlu0 1
      %407 = vperm.xlu0 %406, %v238
      %v408 = vpop.permute.xlu0 %407
      %410 = vset.pattern.permute.xlu0 1
      %411 = vperm.xlu0 %410, %v239
      %v412 = vpop.permute.xlu0 %411
      %414 = vset.pattern.permute.xlu0 1
      %415 = vperm.xlu0 %414, %v240
      %v416 = vpop.permute.xlu0 %415
      %418 = vset.pattern.permute.xlu0 1
      %419 = vperm.xlu0 %418, %v241
      %v420 = vpop.permute.xlu0 %419
      %422 = vset.pattern.permute.xlu0 1
      %423 = vperm.xlu0 %422, %v242
      %v424 = vpop.permute.xlu0 %423
      %v426 = vperm.slane %v210, 1
      %v427 = vperm.slane %v210, 5
      %v430 = vperm.slane %v426, 1
      %v431 = vperm.slane %v427, 1
      %v432 = vmul.f32 %v364, %v430
      %v433 = vmul.f32 %v364, %v431
      %v434 = vmul.f32 %v368, %v430
      %v435 = vmul.f32 %v368, %v431
      %v436 = vmul.f32 %v372, %v430
      %v437 = vmul.f32 %v372, %v431
      %v438 = vmul.f32 %v376, %v430
      %v439 = vmul.f32 %v376, %v431
      %v440 = vmul.f32 %v380, %v430
      %v441 = vmul.f32 %v380, %v431
      %v442 = vmul.f32 %v384, %v430
      %v443 = vmul.f32 %v384, %v431
      %v444 = vmul.f32 %v388, %v430
      %v445 = vmul.f32 %v388, %v431
      %v446 = vmul.f32 %v392, %v430
      %v447 = vmul.f32 %v392, %v431
      %v448 = vmul.f32 %v396, %v430
      %v449 = vmul.f32 %v396, %v431
      %v450 = vmul.f32 %v400, %v430
      %v451 = vmul.f32 %v400, %v431
      %v452 = vmul.f32 %v404, %v430
      %v453 = vmul.f32 %v404, %v431
      %v454 = vmul.f32 %v408, %v430
      %v455 = vmul.f32 %v408, %v431
      %v456 = vmul.f32 %v412, %v430
      %v457 = vmul.f32 %v412, %v431
      %v458 = vmul.f32 %v416, %v430
      %v459 = vmul.f32 %v416, %v431
      %v460 = vmul.f32 %v420, %v430
      %v461 = vmul.f32 %v420, %v431
      %v462 = vmul.f32 %v424, %v430
      %v463 = vmul.f32 %v424, %v431
      %v464 = vadd.f32 %v330, %v432
      %v465 = vadd.f32 %v331, %v433
      %v466 = vadd.f32 %v332, %v434
      %v467 = vadd.f32 %v333, %v435
      %v468 = vadd.f32 %v334, %v436
      %v469 = vadd.f32 %v335, %v437
      %v470 = vadd.f32 %v336, %v438
      %v471 = vadd.f32 %v337, %v439
      %v472 = vadd.f32 %v338, %v440
      %v473 = vadd.f32 %v339, %v441
      %v474 = vadd.f32 %v340, %v442
      %v475 = vadd.f32 %v341, %v443
      %v476 = vadd.f32 %v342, %v444
      %v477 = vadd.f32 %v343, %v445
      %v478 = vadd.f32 %v344, %v446
      %v479 = vadd.f32 %v345, %v447
      %v480 = vadd.f32 %v346, %v448
      %v481 = vadd.f32 %v347, %v449
      %v482 = vadd.f32 %v348, %v450
      %v483 = vadd.f32 %v349, %v451
      %v484 = vadd.f32 %v350, %v452
      %v485 = vadd.f32 %v351, %v453
      %v486 = vadd.f32 %v352, %v454
      %v487 = vadd.f32 %v353, %v455
      %v488 = vadd.f32 %v354, %v456
      %v489 = vadd.f32 %v355, %v457
      %v490 = vadd.f32 %v356, %v458
      %v491 = vadd.f32 %v357, %v459
      %v492 = vadd.f32 %v358, %v460
      %v493 = vadd.f32 %v359, %v461
      %v494 = vadd.f32 %v360, %v462
      %v495 = vadd.f32 %v361, %v463
      %496 = vset.pattern.permute.xlu0 2
      %497 = vperm.xlu0 %496, %v227
      %v498 = vpop.permute.xlu0 %497
      %500 = vset.pattern.permute.xlu0 2
      %501 = vperm.xlu0 %500, %v228
      %v502 = vpop.permute.xlu0 %501
      %504 = vset.pattern.permute.xlu0 2
      %505 = vperm.xlu0 %504, %v229
      %v506 = vpop.permute.xlu0 %505
      %508 = vset.pattern.permute.xlu0 2
      %509 = vperm.xlu0 %508, %v230
      %v510 = vpop.permute.xlu0 %509
      %512 = vset.pattern.permute.xlu0 2
      %513 = vperm.xlu0 %512, %v231
      %v514 = vpop.permute.xlu0 %513
      %516 = vset.pattern.permute.xlu0 2
      %517 = vperm.xlu0 %516, %v232
      %v518 = vpop.permute.xlu0 %517
      %520 = vset.pattern.permute.xlu0 2
      %521 = vperm.xlu0 %520, %v233
      %v522 = vpop.permute.xlu0 %521
      %524 = vset.pattern.permute.xlu0 2
      %525 = vperm.xlu0 %524, %v234
      %v526 = vpop.permute.xlu0 %525
      %528 = vset.pattern.permute.xlu0 2
      %529 = vperm.xlu0 %528, %v235
      %v530 = vpop.permute.xlu0 %529
      %532 = vset.pattern.permute.xlu0 2
      %533 = vperm.xlu0 %532, %v236
      %v534 = vpop.permute.xlu0 %533
      %536 = vset.pattern.permute.xlu0 2
      %537 = vperm.xlu0 %536, %v237
      %v538 = vpop.permute.xlu0 %537
      %540 = vset.pattern.permute.xlu0 2
      %541 = vperm.xlu0 %540, %v238
      %v542 = vpop.permute.xlu0 %541
      %544 = vset.pattern.permute.xlu0 2
      %545 = vperm.xlu0 %544, %v239
      %v546 = vpop.permute.xlu0 %545
      %548 = vset.pattern.permute.xlu0 2
      %549 = vperm.xlu0 %548, %v240
      %v550 = vpop.permute.xlu0 %549
      %552 = vset.pattern.permute.xlu0 2
      %553 = vperm.xlu0 %552, %v241
      %v554 = vpop.permute.xlu0 %553
      %556 = vset.pattern.permute.xlu0 2
      %557 = vperm.xlu0 %556, %v242
      %v558 = vpop.permute.xlu0 %557
      %v560 = vperm.slane %v210, 2
      %v561 = vperm.slane %v210, 6
      %v564 = vperm.slane %v560, 2
      %v565 = vperm.slane %v561, 2
      %v566 = vmul.f32 %v498, %v564
      %v567 = vmul.f32 %v498, %v565
      %v568 = vmul.f32 %v502, %v564
      %v569 = vmul.f32 %v502, %v565
      %v570 = vmul.f32 %v506, %v564
      %v571 = vmul.f32 %v506, %v565
      %v572 = vmul.f32 %v510, %v564
      %v573 = vmul.f32 %v510, %v565
      %v574 = vmul.f32 %v514, %v564
      %v575 = vmul.f32 %v514, %v565
      %v576 = vmul.f32 %v518, %v564
      %v577 = vmul.f32 %v518, %v565
      %v578 = vmul.f32 %v522, %v564
      %v579 = vmul.f32 %v522, %v565
      %v580 = vmul.f32 %v526, %v564
      %v581 = vmul.f32 %v526, %v565
      %v582 = vmul.f32 %v530, %v564
      %v583 = vmul.f32 %v530, %v565
      %v584 = vmul.f32 %v534, %v564
      %v585 = vmul.f32 %v534, %v565
      %v586 = vmul.f32 %v538, %v564
      %v587 = vmul.f32 %v538, %v565
      %v588 = vmul.f32 %v542, %v564
      %v589 = vmul.f32 %v542, %v565
      %v590 = vmul.f32 %v546, %v564
      %v591 = vmul.f32 %v546, %v565
      %v592 = vmul.f32 %v550, %v564
      %v593 = vmul.f32 %v550, %v565
      %v594 = vmul.f32 %v554, %v564
      %v595 = vmul.f32 %v554, %v565
      %v596 = vmul.f32 %v558, %v564
      %v597 = vmul.f32 %v558, %v565
      %v598 = vadd.f32 %v464, %v566
      %v599 = vadd.f32 %v465, %v567
      %v600 = vadd.f32 %v466, %v568
      %v601 = vadd.f32 %v467, %v569
      %v602 = vadd.f32 %v468, %v570
      %v603 = vadd.f32 %v469, %v571
      %v604 = vadd.f32 %v470, %v572
      %v605 = vadd.f32 %v471, %v573
      %v606 = vadd.f32 %v472, %v574
      %v607 = vadd.f32 %v473, %v575
      %v608 = vadd.f32 %v474, %v576
      %v609 = vadd.f32 %v475, %v577
      %v610 = vadd.f32 %v476, %v578
      %v611 = vadd.f32 %v477, %v579
      %v612 = vadd.f32 %v478, %v580
      %v613 = vadd.f32 %v479, %v581
      %v614 = vadd.f32 %v480, %v582
      %v615 = vadd.f32 %v481, %v583
      %v616 = vadd.f32 %v482, %v584
      %v617 = vadd.f32 %v483, %v585
      %v618 = vadd.f32 %v484, %v586
      %v619 = vadd.f32 %v485, %v587
      %v620 = vadd.f32 %v486, %v588
      %v621 = vadd.f32 %v487, %v589
      %v622 = vadd.f32 %v488, %v590
      %v623 = vadd.f32 %v489, %v591
      %v624 = vadd.f32 %v490, %v592
      %v625 = vadd.f32 %v491, %v593
      %v626 = vadd.f32 %v492, %v594
      %v627 = vadd.f32 %v493, %v595
      %v628 = vadd.f32 %v494, %v596
      %v629 = vadd.f32 %v495, %v597
      %630 = vset.pattern.permute.xlu0 3
      %631 = vperm.xlu0 %630, %v227
      %v632 = vpop.permute.xlu0 %631
      %634 = vset.pattern.permute.xlu0 3
      %635 = vperm.xlu0 %634, %v228
      %v636 = vpop.permute.xlu0 %635
      %638 = vset.pattern.permute.xlu0 3
      %639 = vperm.xlu0 %638, %v229
      %v640 = vpop.permute.xlu0 %639
      %642 = vset.pattern.permute.xlu0 3
      %643 = vperm.xlu0 %642, %v230
      %v644 = vpop.permute.xlu0 %643
      %646 = vset.pattern.permute.xlu0 3
      %647 = vperm.xlu0 %646, %v231
      %v648 = vpop.permute.xlu0 %647
      %650 = vset.pattern.permute.xlu0 3
      %651 = vperm.xlu0 %650, %v232
      %v652 = vpop.permute.xlu0 %651
      %654 = vset.pattern.permute.xlu0 3
      %655 = vperm.xlu0 %654, %v233
      %v656 = vpop.permute.xlu0 %655
      %658 = vset.pattern.permute.xlu0 3
      %659 = vperm.xlu0 %658, %v234
      %v660 = vpop.permute.xlu0 %659
      %662 = vset.pattern.permute.xlu0 3
      %663 = vperm.xlu0 %662, %v235
      %v664 = vpop.permute.xlu0 %663
      %666 = vset.pattern.permute.xlu0 3
      %667 = vperm.xlu0 %666, %v236
      %v668 = vpop.permute.xlu0 %667
      %670 = vset.pattern.permute.xlu0 3
      %671 = vperm.xlu0 %670, %v237
      %v672 = vpop.permute.xlu0 %671
      %674 = vset.pattern.permute.xlu0 3
      %675 = vperm.xlu0 %674, %v238
      %v676 = vpop.permute.xlu0 %675
      %678 = vset.pattern.permute.xlu0 3
      %679 = vperm.xlu0 %678, %v239
      %v680 = vpop.permute.xlu0 %679
      %682 = vset.pattern.permute.xlu0 3
      %683 = vperm.xlu0 %682, %v240
      %v684 = vpop.permute.xlu0 %683
      %686 = vset.pattern.permute.xlu0 3
      %687 = vperm.xlu0 %686, %v241
      %v688 = vpop.permute.xlu0 %687
      %690 = vset.pattern.permute.xlu0 3
      %691 = vperm.xlu0 %690, %v242
      %v692 = vpop.permute.xlu0 %691
      %v694 = vperm.slane %v210, 3
      %v695 = vperm.slane %v210, 7
      %v698 = vperm.slane %v694, 3
      %v699 = vperm.slane %v695, 3
      %v700 = vmul.f32 %v632, %v698
      %v701 = vmul.f32 %v632, %v699
      %v702 = vmul.f32 %v636, %v698
      %v703 = vmul.f32 %v636, %v699
      %v704 = vmul.f32 %v640, %v698
      %v705 = vmul.f32 %v640, %v699
      %v706 = vmul.f32 %v644, %v698
      %v707 = vmul.f32 %v644, %v699
      %v708 = vmul.f32 %v648, %v698
      %v709 = vmul.f32 %v648, %v699
      %v710 = vmul.f32 %v652, %v698
      %v711 = vmul.f32 %v652, %v699
      %v712 = vmul.f32 %v656, %v698
      %v713 = vmul.f32 %v656, %v699
      %v714 = vmul.f32 %v660, %v698
      %v715 = vmul.f32 %v660, %v699
      %v716 = vmul.f32 %v664, %v698
      %v717 = vmul.f32 %v664, %v699
      %v718 = vmul.f32 %v668, %v698
      %v719 = vmul.f32 %v668, %v699
      %v720 = vmul.f32 %v672, %v698
      %v721 = vmul.f32 %v672, %v699
      %v722 = vmul.f32 %v676, %v698
      %v723 = vmul.f32 %v676, %v699
      %v724 = vmul.f32 %v680, %v698
      %v725 = vmul.f32 %v680, %v699
      %v726 = vmul.f32 %v684, %v698
      %v727 = vmul.f32 %v684, %v699
      %v728 = vmul.f32 %v688, %v698
      %v729 = vmul.f32 %v688, %v699
      %v730 = vmul.f32 %v692, %v698
      %v731 = vmul.f32 %v692, %v699
      %v732 = vadd.f32 %v598, %v700
      %v733 = vadd.f32 %v599, %v701
      %v734 = vadd.f32 %v600, %v702
      %v735 = vadd.f32 %v601, %v703
      %v736 = vadd.f32 %v602, %v704
      %v737 = vadd.f32 %v603, %v705
      %v738 = vadd.f32 %v604, %v706
      %v739 = vadd.f32 %v605, %v707
      %v740 = vadd.f32 %v606, %v708
      %v741 = vadd.f32 %v607, %v709
      %v742 = vadd.f32 %v608, %v710
      %v743 = vadd.f32 %v609, %v711
      %v744 = vadd.f32 %v610, %v712
      %v745 = vadd.f32 %v611, %v713
      %v746 = vadd.f32 %v612, %v714
      %v747 = vadd.f32 %v613, %v715
      %v748 = vadd.f32 %v614, %v716
      %v749 = vadd.f32 %v615, %v717
      %v750 = vadd.f32 %v616, %v718
      %v751 = vadd.f32 %v617, %v719
      %v752 = vadd.f32 %v618, %v720
      %v753 = vadd.f32 %v619, %v721
      %v754 = vadd.f32 %v620, %v722
      %v755 = vadd.f32 %v621, %v723
      %v756 = vadd.f32 %v622, %v724
      %v757 = vadd.f32 %v623, %v725
      %v758 = vadd.f32 %v624, %v726
      %v759 = vadd.f32 %v625, %v727
      %v760 = vadd.f32 %v626, %v728
      %v761 = vadd.f32 %v627, %v729
      %v762 = vadd.f32 %v628, %v730
      %v763 = vadd.f32 %v629, %v731
      %v764 = vmax.f32 %v732, 0.0
      %v765 = vmax.f32 %v733, 0.0
      %v766 = vmax.f32 %v734, 0.0
      %v767 = vmax.f32 %v735, 0.0
      %v768 = vmax.f32 %v736, 0.0
      %v769 = vmax.f32 %v737, 0.0
      %v770 = vmax.f32 %v738, 0.0
      %v771 = vmax.f32 %v739, 0.0
      %v772 = vmax.f32 %v740, 0.0
      %v773 = vmax.f32 %v741, 0.0
      %v774 = vmax.f32 %v742, 0.0
      %v775 = vmax.f32 %v743, 0.0
      %v776 = vmax.f32 %v744, 0.0
      %v777 = vmax.f32 %v745, 0.0
      %v778 = vmax.f32 %v746, 0.0
      %v779 = vmax.f32 %v747, 0.0
      %v780 = vmax.f32 %v748, 0.0
      %v781 = vmax.f32 %v749, 0.0
      %v782 = vmax.f32 %v750, 0.0
      %v783 = vmax.f32 %v751, 0.0
      %v784 = vmax.f32 %v752, 0.0
      %v785 = vmax.f32 %v753, 0.0
      %v786 = vmax.f32 %v754, 0.0
      %v787 = vmax.f32 %v755, 0.0
      %v788 = vmax.f32 %v756, 0.0
      %v789 = vmax.f32 %v757, 0.0
      %v790 = vmax.f32 %v758, 0.0
      %v791 = vmax.f32 %v759, 0.0
      %v792 = vmax.f32 %v760, 0.0
      %v793 = vmax.f32 %v761, 0.0
      %v794 = vmax.f32 %v762, 0.0
      %v795 = vmax.f32 %v763, 0.0
      %v796 = vld [vmem:[%s2] sm:$0x1]
      %v797 = vpack.c.bf16 %v766, %v764
      %v798 = vpack.c.bf16 %v767, %v765
      %v799 = vpack.c.bf16 %v770, %v768
      %v800 = vpack.c.bf16 %v771, %v769
      %v801 = vpack.c.bf16 %v774, %v772
      %v802 = vpack.c.bf16 %v775, %v773
      %v803 = vpack.c.bf16 %v778, %v776
      %v804 = vpack.c.bf16 %v779, %v777
      %v805 = vpack.c.bf16 %v782, %v780
      %v806 = vpack.c.bf16 %v783, %v781
      %v807 = vpack.c.bf16 %v786, %v784
      %v808 = vpack.c.bf16 %v787, %v785
      %v809 = vpack.c.bf16 %v790, %v788
      %v810 = vpack.c.bf16 %v791, %v789
      %v811 = vpack.c.bf16 %v794, %v792
      %v812 = vpack.c.bf16 %v795, %v793
      %v813 = vld [vmem:[%s1 + $0x40] sm:$0xf]
      %v814 = vld [vmem:[%s1 + $0x44] sm:$0xf]
      %v815 = vld [vmem:[%s1 + $0x48] sm:$0xf]
      %v816 = vld [vmem:[%s1 + $0x4c] sm:$0xf]
      %v817 = vld [vmem:[%s1 + $0x50] sm:$0xf]
      %v818 = vld [vmem:[%s1 + $0x54] sm:$0xf]
      %v819 = vld [vmem:[%s1 + $0x58] sm:$0xf]
      %v820 = vld [vmem:[%s1 + $0x5c] sm:$0xf]
      %v821 = vld [vmem:[%s1 + $0x60] sm:$0xf]
      %v822 = vld [vmem:[%s1 + $0x64] sm:$0xf]
      %v823 = vld [vmem:[%s1 + $0x68] sm:$0xf]
      %v824 = vld [vmem:[%s1 + $0x6c] sm:$0xf]
      %v825 = vld [vmem:[%s1 + $0x70] sm:$0xf]
      %v826 = vld [vmem:[%s1 + $0x74] sm:$0xf]
      %v827 = vld [vmem:[%s1 + $0x78] sm:$0xf]
      %v828 = vld [vmem:[%s1 + $0x7c] sm:$0xf]
      %v829 = vunpack.c.l.bf16 %v813
      %v830 = vunpack.c.l.bf16 %v814
      %v831 = vunpack.c.l.bf16 %v815
      %v832 = vunpack.c.l.bf16 %v816
      %v833 = vunpack.c.l.bf16 %v817
      %v834 = vunpack.c.l.bf16 %v818
      %v835 = vunpack.c.l.bf16 %v819
      %v836 = vunpack.c.l.bf16 %v820
      %v837 = vunpack.c.l.bf16 %v821
      %v838 = vunpack.c.l.bf16 %v822
      %v839 = vunpack.c.l.bf16 %v823
      %v840 = vunpack.c.l.bf16 %v824
      %v841 = vunpack.c.l.bf16 %v825
      %v842 = vunpack.c.l.bf16 %v826
      %v843 = vunpack.c.l.bf16 %v827
      %v844 = vunpack.c.l.bf16 %v828
      %846 = vset.pattern.permute.xlu0 0
      %847 = vperm.xlu0 %846, %v829
      %v848 = vpop.permute.xlu0 %847
      %851 = vset.pattern.permute.xlu0 0
      %852 = vperm.xlu0 %851, %v830
      %v853 = vpop.permute.xlu0 %852
      %856 = vset.pattern.permute.xlu0 0
      %857 = vperm.xlu0 %856, %v831
      %v858 = vpop.permute.xlu0 %857
      %861 = vset.pattern.permute.xlu0 0
      %862 = vperm.xlu0 %861, %v832
      %v863 = vpop.permute.xlu0 %862
      %866 = vset.pattern.permute.xlu0 0
      %867 = vperm.xlu0 %866, %v833
      %v868 = vpop.permute.xlu0 %867
      %871 = vset.pattern.permute.xlu0 0
      %872 = vperm.xlu0 %871, %v834
      %v873 = vpop.permute.xlu0 %872
      %876 = vset.pattern.permute.xlu0 0
      %877 = vperm.xlu0 %876, %v835
      %v878 = vpop.permute.xlu0 %877
      %881 = vset.pattern.permute.xlu0 0
      %882 = vperm.xlu0 %881, %v836
      %v883 = vpop.permute.xlu0 %882
      %886 = vset.pattern.permute.xlu0 0
      %887 = vperm.xlu0 %886, %v837
      %v888 = vpop.permute.xlu0 %887
      %891 = vset.pattern.permute.xlu0 0
      %892 = vperm.xlu0 %891, %v838
      %v893 = vpop.permute.xlu0 %892
      %896 = vset.pattern.permute.xlu0 0
      %897 = vperm.xlu0 %896, %v839
      %v898 = vpop.permute.xlu0 %897
      %901 = vset.pattern.permute.xlu0 0
      %902 = vperm.xlu0 %901, %v840
      %v903 = vpop.permute.xlu0 %902
      %906 = vset.pattern.permute.xlu0 0
      %907 = vperm.xlu0 %906, %v841
      %v908 = vpop.permute.xlu0 %907
      %911 = vset.pattern.permute.xlu0 0
      %912 = vperm.xlu0 %911, %v842
      %v913 = vpop.permute.xlu0 %912
      %916 = vset.pattern.permute.xlu0 0
      %917 = vperm.xlu0 %916, %v843
      %v918 = vpop.permute.xlu0 %917
      %921 = vset.pattern.permute.xlu0 0
      %922 = vperm.xlu0 %921, %v844
      %v923 = vpop.permute.xlu0 %922
      %v925 = vmul.f32 %v848, %v328
      %v926 = vmul.f32 %v848, %v329
      %v927 = vmul.f32 %v853, %v328
      %v928 = vmul.f32 %v853, %v329
      %v929 = vmul.f32 %v858, %v328
      %v930 = vmul.f32 %v858, %v329
      %v931 = vmul.f32 %v863, %v328
      %v932 = vmul.f32 %v863, %v329
      %v933 = vmul.f32 %v868, %v328
      %v934 = vmul.f32 %v868, %v329
      %v935 = vmul.f32 %v873, %v328
      %v936 = vmul.f32 %v873, %v329
      %v937 = vmul.f32 %v878, %v328
      %v938 = vmul.f32 %v878, %v329
      %v939 = vmul.f32 %v883, %v328
      %v940 = vmul.f32 %v883, %v329
      %v941 = vmul.f32 %v888, %v328
      %v942 = vmul.f32 %v888, %v329
      %v943 = vmul.f32 %v893, %v328
      %v944 = vmul.f32 %v893, %v329
      %v945 = vmul.f32 %v898, %v328
      %v946 = vmul.f32 %v898, %v329
      %v947 = vmul.f32 %v903, %v328
      %v948 = vmul.f32 %v903, %v329
      %v949 = vmul.f32 %v908, %v328
      %v950 = vmul.f32 %v908, %v329
      %v951 = vmul.f32 %v913, %v328
      %v952 = vmul.f32 %v913, %v329
      %v953 = vmul.f32 %v918, %v328
      %v954 = vmul.f32 %v918, %v329
      %v955 = vmul.f32 %v923, %v328
      %v956 = vmul.f32 %v923, %v329
      %957 = vset.pattern.permute.xlu0 1
      %958 = vperm.xlu0 %957, %v829
      %v959 = vpop.permute.xlu0 %958
      %961 = vset.pattern.permute.xlu0 1
      %962 = vperm.xlu0 %961, %v830
      %v963 = vpop.permute.xlu0 %962
      %965 = vset.pattern.permute.xlu0 1
      %966 = vperm.xlu0 %965, %v831
      %v967 = vpop.permute.xlu0 %966
      %969 = vset.pattern.permute.xlu0 1
      %970 = vperm.xlu0 %969, %v832
      %v971 = vpop.permute.xlu0 %970
      %973 = vset.pattern.permute.xlu0 1
      %974 = vperm.xlu0 %973, %v833
      %v975 = vpop.permute.xlu0 %974
      %977 = vset.pattern.permute.xlu0 1
      %978 = vperm.xlu0 %977, %v834
      %v979 = vpop.permute.xlu0 %978
      %981 = vset.pattern.permute.xlu0 1
      %982 = vperm.xlu0 %981, %v835
      %v983 = vpop.permute.xlu0 %982
      %985 = vset.pattern.permute.xlu0 1
      %986 = vperm.xlu0 %985, %v836
      %v987 = vpop.permute.xlu0 %986
      %989 = vset.pattern.permute.xlu0 1
      %990 = vperm.xlu0 %989, %v837
      %v991 = vpop.permute.xlu0 %990
      %993 = vset.pattern.permute.xlu0 1
      %994 = vperm.xlu0 %993, %v838
      %v995 = vpop.permute.xlu0 %994
      %997 = vset.pattern.permute.xlu0 1
      %998 = vperm.xlu0 %997, %v839
      %v999 = vpop.permute.xlu0 %998
      %1001 = vset.pattern.permute.xlu0 1
      %1002 = vperm.xlu0 %1001, %v840
      %v1003 = vpop.permute.xlu0 %1002
      %1005 = vset.pattern.permute.xlu0 1
      %1006 = vperm.xlu0 %1005, %v841
      %v1007 = vpop.permute.xlu0 %1006
      %1009 = vset.pattern.permute.xlu0 1
      %1010 = vperm.xlu0 %1009, %v842
      %v1011 = vpop.permute.xlu0 %1010
      %1013 = vset.pattern.permute.xlu0 1
      %1014 = vperm.xlu0 %1013, %v843
      %v1015 = vpop.permute.xlu0 %1014
      %1017 = vset.pattern.permute.xlu0 1
      %1018 = vperm.xlu0 %1017, %v844
      %v1019 = vpop.permute.xlu0 %1018
      %v1021 = vmul.f32 %v959, %v430
      %v1022 = vmul.f32 %v959, %v431
      %v1023 = vmul.f32 %v963, %v430
      %v1024 = vmul.f32 %v963, %v431
      %v1025 = vmul.f32 %v967, %v430
      %v1026 = vmul.f32 %v967, %v431
      %v1027 = vmul.f32 %v971, %v430
      %v1028 = vmul.f32 %v971, %v431
      %v1029 = vmul.f32 %v975, %v430
      %v1030 = vmul.f32 %v975, %v431
      %v1031 = vmul.f32 %v979, %v430
      %v1032 = vmul.f32 %v979, %v431
      %v1033 = vmul.f32 %v983, %v430
      %v1034 = vmul.f32 %v983, %v431
      %v1035 = vmul.f32 %v987, %v430
      %v1036 = vmul.f32 %v987, %v431
      %v1037 = vmul.f32 %v991, %v430
      %v1038 = vmul.f32 %v991, %v431
      %v1039 = vmul.f32 %v995, %v430
      %v1040 = vmul.f32 %v995, %v431
      %v1041 = vmul.f32 %v999, %v430
      %v1042 = vmul.f32 %v999, %v431
      %v1043 = vmul.f32 %v1003, %v430
      %v1044 = vmul.f32 %v1003, %v431
      %v1045 = vmul.f32 %v1007, %v430
      %v1046 = vmul.f32 %v1007, %v431
      %v1047 = vmul.f32 %v1011, %v430
      %v1048 = vmul.f32 %v1011, %v431
      %v1049 = vmul.f32 %v1015, %v430
      %v1050 = vmul.f32 %v1015, %v431
      %v1051 = vmul.f32 %v1019, %v430
      %v1052 = vmul.f32 %v1019, %v431
      %v1053 = vadd.f32 %v925, %v1021
      %v1054 = vadd.f32 %v926, %v1022
      %v1055 = vadd.f32 %v927, %v1023
      %v1056 = vadd.f32 %v928, %v1024
      %v1057 = vadd.f32 %v929, %v1025
      %v1058 = vadd.f32 %v930, %v1026
      %v1059 = vadd.f32 %v931, %v1027
      %v1060 = vadd.f32 %v932, %v1028
      %v1061 = vadd.f32 %v933, %v1029
      %v1062 = vadd.f32 %v934, %v1030
      %v1063 = vadd.f32 %v935, %v1031
      %v1064 = vadd.f32 %v936, %v1032
      %v1065 = vadd.f32 %v937, %v1033
      %v1066 = vadd.f32 %v938, %v1034
      %v1067 = vadd.f32 %v939, %v1035
      %v1068 = vadd.f32 %v940, %v1036
      %v1069 = vadd.f32 %v941, %v1037
      %v1070 = vadd.f32 %v942, %v1038
      %v1071 = vadd.f32 %v943, %v1039
      %v1072 = vadd.f32 %v944, %v1040
      %v1073 = vadd.f32 %v945, %v1041
      %v1074 = vadd.f32 %v946, %v1042
      %v1075 = vadd.f32 %v947, %v1043
      %v1076 = vadd.f32 %v948, %v1044
      %v1077 = vadd.f32 %v949, %v1045
      %v1078 = vadd.f32 %v950, %v1046
      %v1079 = vadd.f32 %v951, %v1047
      %v1080 = vadd.f32 %v952, %v1048
      %v1081 = vadd.f32 %v953, %v1049
      %v1082 = vadd.f32 %v954, %v1050
      %v1083 = vadd.f32 %v955, %v1051
      %v1084 = vadd.f32 %v956, %v1052
      %1085 = vset.pattern.permute.xlu0 2
      %1086 = vperm.xlu0 %1085, %v829
      %v1087 = vpop.permute.xlu0 %1086
      %1089 = vset.pattern.permute.xlu0 2
      %1090 = vperm.xlu0 %1089, %v830
      %v1091 = vpop.permute.xlu0 %1090
      %1093 = vset.pattern.permute.xlu0 2
      %1094 = vperm.xlu0 %1093, %v831
      %v1095 = vpop.permute.xlu0 %1094
      %1097 = vset.pattern.permute.xlu0 2
      %1098 = vperm.xlu0 %1097, %v832
      %v1099 = vpop.permute.xlu0 %1098
      %1101 = vset.pattern.permute.xlu0 2
      %1102 = vperm.xlu0 %1101, %v833
      %v1103 = vpop.permute.xlu0 %1102
      %1105 = vset.pattern.permute.xlu0 2
      %1106 = vperm.xlu0 %1105, %v834
      %v1107 = vpop.permute.xlu0 %1106
      %1109 = vset.pattern.permute.xlu0 2
      %1110 = vperm.xlu0 %1109, %v835
      %v1111 = vpop.permute.xlu0 %1110
      %1113 = vset.pattern.permute.xlu0 2
      %1114 = vperm.xlu0 %1113, %v836
      %v1115 = vpop.permute.xlu0 %1114
      %1117 = vset.pattern.permute.xlu0 2
      %1118 = vperm.xlu0 %1117, %v837
      %v1119 = vpop.permute.xlu0 %1118
      %1121 = vset.pattern.permute.xlu0 2
      %1122 = vperm.xlu0 %1121, %v838
      %v1123 = vpop.permute.xlu0 %1122
      %1125 = vset.pattern.permute.xlu0 2
      %1126 = vperm.xlu0 %1125, %v839
      %v1127 = vpop.permute.xlu0 %1126
      %1129 = vset.pattern.permute.xlu0 2
      %1130 = vperm.xlu0 %1129, %v840
      %v1131 = vpop.permute.xlu0 %1130
      %1133 = vset.pattern.permute.xlu0 2
      %1134 = vperm.xlu0 %1133, %v841
      %v1135 = vpop.permute.xlu0 %1134
      %1137 = vset.pattern.permute.xlu0 2
      %1138 = vperm.xlu0 %1137, %v842
      %v1139 = vpop.permute.xlu0 %1138
      %1141 = vset.pattern.permute.xlu0 2
      %1142 = vperm.xlu0 %1141, %v843
      %v1143 = vpop.permute.xlu0 %1142
      %1145 = vset.pattern.permute.xlu0 2
      %1146 = vperm.xlu0 %1145, %v844
      %v1147 = vpop.permute.xlu0 %1146
      %v1149 = vmul.f32 %v1087, %v564
      %v1150 = vmul.f32 %v1087, %v565
      %v1151 = vmul.f32 %v1091, %v564
      %v1152 = vmul.f32 %v1091, %v565
      %v1153 = vmul.f32 %v1095, %v564
      %v1154 = vmul.f32 %v1095, %v565
      %v1155 = vmul.f32 %v1099, %v564
      %v1156 = vmul.f32 %v1099, %v565
      %v1157 = vmul.f32 %v1103, %v564
      %v1158 = vmul.f32 %v1103, %v565
      %v1159 = vmul.f32 %v1107, %v564
      %v1160 = vmul.f32 %v1107, %v565
      %v1161 = vmul.f32 %v1111, %v564
      %v1162 = vmul.f32 %v1111, %v565
      %v1163 = vmul.f32 %v1115, %v564
      %v1164 = vmul.f32 %v1115, %v565
      %v1165 = vmul.f32 %v1119, %v564
      %v1166 = vmul.f32 %v1119, %v565
      %v1167 = vmul.f32 %v1123, %v564
      %v1168 = vmul.f32 %v1123, %v565
      %v1169 = vmul.f32 %v1127, %v564
      %v1170 = vmul.f32 %v1127, %v565
      %v1171 = vmul.f32 %v1131, %v564
      %v1172 = vmul.f32 %v1131, %v565
      %v1173 = vmul.f32 %v1135, %v564
      %v1174 = vmul.f32 %v1135, %v565
      %v1175 = vmul.f32 %v1139, %v564
      %v1176 = vmul.f32 %v1139, %v565
      %v1177 = vmul.f32 %v1143, %v564
      %v1178 = vmul.f32 %v1143, %v565
      %v1179 = vmul.f32 %v1147, %v564
      %v1180 = vmul.f32 %v1147, %v565
      %v1181 = vadd.f32 %v1053, %v1149
      %v1182 = vadd.f32 %v1054, %v1150
      %v1183 = vadd.f32 %v1055, %v1151
      %v1184 = vadd.f32 %v1056, %v1152
      %v1185 = vadd.f32 %v1057, %v1153
      %v1186 = vadd.f32 %v1058, %v1154
      %v1187 = vadd.f32 %v1059, %v1155
      %v1188 = vadd.f32 %v1060, %v1156
      %v1189 = vadd.f32 %v1061, %v1157
      %v1190 = vadd.f32 %v1062, %v1158
      %v1191 = vadd.f32 %v1063, %v1159
      %v1192 = vadd.f32 %v1064, %v1160
      %v1193 = vadd.f32 %v1065, %v1161
      %v1194 = vadd.f32 %v1066, %v1162
      %v1195 = vadd.f32 %v1067, %v1163
      %v1196 = vadd.f32 %v1068, %v1164
      %v1197 = vadd.f32 %v1069, %v1165
      %v1198 = vadd.f32 %v1070, %v1166
      %v1199 = vadd.f32 %v1071, %v1167
      %v1200 = vadd.f32 %v1072, %v1168
      %v1201 = vadd.f32 %v1073, %v1169
      %v1202 = vadd.f32 %v1074, %v1170
      %v1203 = vadd.f32 %v1075, %v1171
      %v1204 = vadd.f32 %v1076, %v1172
      %v1205 = vadd.f32 %v1077, %v1173
      %v1206 = vadd.f32 %v1078, %v1174
      %v1207 = vadd.f32 %v1079, %v1175
      %v1208 = vadd.f32 %v1080, %v1176
      %v1209 = vadd.f32 %v1081, %v1177
      %v1210 = vadd.f32 %v1082, %v1178
      %v1211 = vadd.f32 %v1083, %v1179
      %v1212 = vadd.f32 %v1084, %v1180
      %1213 = vset.pattern.permute.xlu0 3
      %1214 = vperm.xlu0 %1213, %v829
      %v1215 = vpop.permute.xlu0 %1214
      %1217 = vset.pattern.permute.xlu0 3
      %1218 = vperm.xlu0 %1217, %v830
      %v1219 = vpop.permute.xlu0 %1218
      %1221 = vset.pattern.permute.xlu0 3
      %1222 = vperm.xlu0 %1221, %v831
      %v1223 = vpop.permute.xlu0 %1222
      %1225 = vset.pattern.permute.xlu0 3
      %1226 = vperm.xlu0 %1225, %v832
      %v1227 = vpop.permute.xlu0 %1226
      %1229 = vset.pattern.permute.xlu0 3
      %1230 = vperm.xlu0 %1229, %v833
      %v1231 = vpop.permute.xlu0 %1230
      %1233 = vset.pattern.permute.xlu0 3
      %1234 = vperm.xlu0 %1233, %v834
      %v1235 = vpop.permute.xlu0 %1234
      %1237 = vset.pattern.permute.xlu0 3
      %1238 = vperm.xlu0 %1237, %v835
      %v1239 = vpop.permute.xlu0 %1238
      %1241 = vset.pattern.permute.xlu0 3
      %1242 = vperm.xlu0 %1241, %v836
      %v1243 = vpop.permute.xlu0 %1242
      %1245 = vset.pattern.permute.xlu0 3
      %1246 = vperm.xlu0 %1245, %v837
      %v1247 = vpop.permute.xlu0 %1246
      %1249 = vset.pattern.permute.xlu0 3
      %1250 = vperm.xlu0 %1249, %v838
      %v1251 = vpop.permute.xlu0 %1250
      %1253 = vset.pattern.permute.xlu0 3
      %1254 = vperm.xlu0 %1253, %v839
      %v1255 = vpop.permute.xlu0 %1254
      %1257 = vset.pattern.permute.xlu0 3
      %1258 = vperm.xlu0 %1257, %v840
      %v1259 = vpop.permute.xlu0 %1258
      %1261 = vset.pattern.permute.xlu0 3
      %1262 = vperm.xlu0 %1261, %v841
      %v1263 = vpop.permute.xlu0 %1262
      %1265 = vset.pattern.permute.xlu0 3
      %1266 = vperm.xlu0 %1265, %v842
      %v1267 = vpop.permute.xlu0 %1266
      %1269 = vset.pattern.permute.xlu0 3
      %1270 = vperm.xlu0 %1269, %v843
      %v1271 = vpop.permute.xlu0 %1270
      %1273 = vset.pattern.permute.xlu0 3
      %1274 = vperm.xlu0 %1273, %v844
      %v1275 = vpop.permute.xlu0 %1274
      %v1277 = vmul.f32 %v1215, %v698
      %v1278 = vmul.f32 %v1215, %v699
      %v1279 = vmul.f32 %v1219, %v698
      %v1280 = vmul.f32 %v1219, %v699
      %v1281 = vmul.f32 %v1223, %v698
      %v1282 = vmul.f32 %v1223, %v699
      %v1283 = vmul.f32 %v1227, %v698
      %v1284 = vmul.f32 %v1227, %v699
      %v1285 = vmul.f32 %v1231, %v698
      %v1286 = vmul.f32 %v1231, %v699
      %v1287 = vmul.f32 %v1235, %v698
      %v1288 = vmul.f32 %v1235, %v699
      %v1289 = vmul.f32 %v1239, %v698
      %v1290 = vmul.f32 %v1239, %v699
      %v1291 = vmul.f32 %v1243, %v698
      %v1292 = vmul.f32 %v1243, %v699
      %v1293 = vmul.f32 %v1247, %v698
      %v1294 = vmul.f32 %v1247, %v699
      %v1295 = vmul.f32 %v1251, %v698
      %v1296 = vmul.f32 %v1251, %v699
      %v1297 = vmul.f32 %v1255, %v698
      %v1298 = vmul.f32 %v1255, %v699
      %v1299 = vmul.f32 %v1259, %v698
      %v1300 = vmul.f32 %v1259, %v699
      %v1301 = vmul.f32 %v1263, %v698
      %v1302 = vmul.f32 %v1263, %v699
      %v1303 = vmul.f32 %v1267, %v698
      %v1304 = vmul.f32 %v1267, %v699
      %v1305 = vmul.f32 %v1271, %v698
      %v1306 = vmul.f32 %v1271, %v699
      %v1307 = vmul.f32 %v1275, %v698
      %v1308 = vmul.f32 %v1275, %v699
      %v1309 = vadd.f32 %v1181, %v1277
      %v1310 = vadd.f32 %v1182, %v1278
      %v1311 = vadd.f32 %v1183, %v1279
      %v1312 = vadd.f32 %v1184, %v1280
      %v1313 = vadd.f32 %v1185, %v1281
      %v1314 = vadd.f32 %v1186, %v1282
      %v1315 = vadd.f32 %v1187, %v1283
      %v1316 = vadd.f32 %v1188, %v1284
      %v1317 = vadd.f32 %v1189, %v1285
      %v1318 = vadd.f32 %v1190, %v1286
      %v1319 = vadd.f32 %v1191, %v1287
      %v1320 = vadd.f32 %v1192, %v1288
      %v1321 = vadd.f32 %v1193, %v1289
      %v1322 = vadd.f32 %v1194, %v1290
      %v1323 = vadd.f32 %v1195, %v1291
      %v1324 = vadd.f32 %v1196, %v1292
      %v1325 = vadd.f32 %v1197, %v1293
      %v1326 = vadd.f32 %v1198, %v1294
      %v1327 = vadd.f32 %v1199, %v1295
      %v1328 = vadd.f32 %v1200, %v1296
      %v1329 = vadd.f32 %v1201, %v1297
      %v1330 = vadd.f32 %v1202, %v1298
      %v1331 = vadd.f32 %v1203, %v1299
      %v1332 = vadd.f32 %v1204, %v1300
      %v1333 = vadd.f32 %v1205, %v1301
      %v1334 = vadd.f32 %v1206, %v1302
      %v1335 = vadd.f32 %v1207, %v1303
      %v1336 = vadd.f32 %v1208, %v1304
      %v1337 = vadd.f32 %v1209, %v1305
      %v1338 = vadd.f32 %v1210, %v1306
      %v1339 = vadd.f32 %v1211, %v1307
      %v1340 = vadd.f32 %v1212, %v1308
      %v1341 = vmax.f32 %v1309, 0.0
      %v1342 = vmax.f32 %v1310, 0.0
      %v1343 = vmax.f32 %v1311, 0.0
      %v1344 = vmax.f32 %v1312, 0.0
      %v1345 = vmax.f32 %v1313, 0.0
      %v1346 = vmax.f32 %v1314, 0.0
      %v1347 = vmax.f32 %v1315, 0.0
      %v1348 = vmax.f32 %v1316, 0.0
      %v1349 = vmax.f32 %v1317, 0.0
      %v1350 = vmax.f32 %v1318, 0.0
      %v1351 = vmax.f32 %v1319, 0.0
      %v1352 = vmax.f32 %v1320, 0.0
      %v1353 = vmax.f32 %v1321, 0.0
      %v1354 = vmax.f32 %v1322, 0.0
      %v1355 = vmax.f32 %v1323, 0.0
      %v1356 = vmax.f32 %v1324, 0.0
      %v1357 = vmax.f32 %v1325, 0.0
      %v1358 = vmax.f32 %v1326, 0.0
      %v1359 = vmax.f32 %v1327, 0.0
      %v1360 = vmax.f32 %v1328, 0.0
      %v1361 = vmax.f32 %v1329, 0.0
      %v1362 = vmax.f32 %v1330, 0.0
      %v1363 = vmax.f32 %v1331, 0.0
      %v1364 = vmax.f32 %v1332, 0.0
      %v1365 = vmax.f32 %v1333, 0.0
      %v1366 = vmax.f32 %v1334, 0.0
      %v1367 = vmax.f32 %v1335, 0.0
      %v1368 = vmax.f32 %v1336, 0.0
      %v1369 = vmax.f32 %v1337, 0.0
      %v1370 = vmax.f32 %v1338, 0.0
      %v1371 = vmax.f32 %v1339, 0.0
      %v1372 = vmax.f32 %v1340, 0.0
      %v1373 = vld [vmem:[%s2 + $0x1] sm:$0x1]
      %v1374 = vpack.c.bf16 %v1343, %v1341
      %v1375 = vpack.c.bf16 %v1344, %v1342
      %v1376 = vpack.c.bf16 %v1347, %v1345
      %v1377 = vpack.c.bf16 %v1348, %v1346
      %v1378 = vpack.c.bf16 %v1351, %v1349
      %v1379 = vpack.c.bf16 %v1352, %v1350
      %v1380 = vpack.c.bf16 %v1355, %v1353
      %v1381 = vpack.c.bf16 %v1356, %v1354
      %v1382 = vpack.c.bf16 %v1359, %v1357
      %v1383 = vpack.c.bf16 %v1360, %v1358
      %v1384 = vpack.c.bf16 %v1363, %v1361
      %v1385 = vpack.c.bf16 %v1364, %v1362
      %v1386 = vpack.c.bf16 %v1367, %v1365
      %v1387 = vpack.c.bf16 %v1368, %v1366
      %v1388 = vpack.c.bf16 %v1371, %v1369
      %v1389 = vpack.c.bf16 %v1372, %v1370
      %1390 = vmatpush.bf16.msra.mxu0 %v1388
      %1391 = vmatpush.bf16.msra.mxu0 %v1386
      %1392 = vmatpush.bf16.msra.mxu0 %v1384
      %1393 = vmatpush.bf16.msra.mxu0 %v1382
      %1394 = vmatpush.bf16.msra.mxu0 %v1380
      %1395 = vmatpush.bf16.msra.mxu0 %v1378
      %1396 = vmatpush.bf16.msra.mxu0 %v1376
      %1397 = vmatpush.bf16.msra.mxu0 %v1374
      %1398 = vmatmul.bf16.gmra.mxu0 %v1373
      %v1399 = vpop.f32.mrf.mxu0
      %v1400 = vadd.f32 0.0, %v1399
      %v1401 = vpop.f32.mrf.mxu0
      %1402 = vdwg.mxu0
      %1403 = vmatpush.bf16.msra.mxu0 %v1389
      %1404 = vmatpush.bf16.msra.mxu0 %v1387
      %1405 = vmatpush.bf16.msra.mxu0 %v1385
      %1406 = vmatpush.bf16.msra.mxu0 %v1383
      %1407 = vmatpush.bf16.msra.mxu0 %v1381
      %1408 = vmatpush.bf16.msra.mxu0 %v1379
      %1409 = vmatpush.bf16.msra.mxu0 %v1377
      %1410 = vmatpush.bf16.msra.mxu0 %v1375
      %1411 = vmatmul.bf16.gmra.mxu0 %v1373
      %v1412 = vpop.f32.mrf.mxu0
      %v1413 = vadd.f32 0.0, %v1412
      %v1414 = vpop.f32.mrf.mxu0
      %1415 = vdwg.mxu0
      %1416 = vmatpush.bf16.msra.mxu0 %v811
      %1417 = vmatpush.bf16.msra.mxu0 %v809
      %1418 = vmatpush.bf16.msra.mxu0 %v807
      %1419 = vmatpush.bf16.msra.mxu0 %v805
      %1420 = vmatpush.bf16.msra.mxu0 %v803
      %1421 = vmatpush.bf16.msra.mxu0 %v801
      %1422 = vmatpush.bf16.msra.mxu0 %v799
      %1423 = vmatpush.bf16.msra.mxu0 %v797
      %1424 = vmatmul.bf16.gmra.mxu0 %v796
      %v1425 = vpop.f32.mrf.mxu0
      %v1426 = vadd.f32 %v1400, %v1425
      %v1427 = vpop.f32.mrf.mxu0
      %1428 = vdwg.mxu0
      %1429 = vmatpush.bf16.msra.mxu0 %v812
      %1430 = vmatpush.bf16.msra.mxu0 %v810
      %1431 = vmatpush.bf16.msra.mxu0 %v808
      %1432 = vmatpush.bf16.msra.mxu0 %v806
      %1433 = vmatpush.bf16.msra.mxu0 %v804
      %1434 = vmatpush.bf16.msra.mxu0 %v802
      %1435 = vmatpush.bf16.msra.mxu0 %v800
      %1436 = vmatpush.bf16.msra.mxu0 %v798
      %1437 = vmatmul.bf16.gmra.mxu0 %v796
      %v1438 = vpop.f32.mrf.mxu0
      %v1439 = vadd.f32 %v1413, %v1438
      %v1440 = vpop.f32.mrf.mxu0
      %1441 = vdwg.mxu0
      %v1442 = vld [vmem:[%s1 + $0x80] sm:$0xf]
      %v1443 = vld [vmem:[%s1 + $0x84] sm:$0xf]
      %v1444 = vld [vmem:[%s1 + $0x88] sm:$0xf]
      %v1445 = vld [vmem:[%s1 + $0x8c] sm:$0xf]
      %v1446 = vld [vmem:[%s1 + $0x90] sm:$0xf]
      %v1447 = vld [vmem:[%s1 + $0x94] sm:$0xf]
      %v1448 = vld [vmem:[%s1 + $0x98] sm:$0xf]
      %v1449 = vld [vmem:[%s1 + $0x9c] sm:$0xf]
      %v1450 = vld [vmem:[%s1 + $0xa0] sm:$0xf]
      %v1451 = vld [vmem:[%s1 + $0xa4] sm:$0xf]
      %v1452 = vld [vmem:[%s1 + $0xa8] sm:$0xf]
      %v1453 = vld [vmem:[%s1 + $0xac] sm:$0xf]
      %v1454 = vld [vmem:[%s1 + $0xb0] sm:$0xf]
      %v1455 = vld [vmem:[%s1 + $0xb4] sm:$0xf]
      %v1456 = vld [vmem:[%s1 + $0xb8] sm:$0xf]
      %v1457 = vld [vmem:[%s1 + $0xbc] sm:$0xf]
      %v1458 = vunpack.c.l.bf16 %v1442
      %v1459 = vunpack.c.l.bf16 %v1443
      %v1460 = vunpack.c.l.bf16 %v1444
      %v1461 = vunpack.c.l.bf16 %v1445
      %v1462 = vunpack.c.l.bf16 %v1446
      %v1463 = vunpack.c.l.bf16 %v1447
      %v1464 = vunpack.c.l.bf16 %v1448
      %v1465 = vunpack.c.l.bf16 %v1449
      %v1466 = vunpack.c.l.bf16 %v1450
      %v1467 = vunpack.c.l.bf16 %v1451
      %v1468 = vunpack.c.l.bf16 %v1452
      %v1469 = vunpack.c.l.bf16 %v1453
      %v1470 = vunpack.c.l.bf16 %v1454
      %v1471 = vunpack.c.l.bf16 %v1455
      %v1472 = vunpack.c.l.bf16 %v1456
      %v1473 = vunpack.c.l.bf16 %v1457
      %1475 = vset.pattern.permute.xlu0 0
      %1476 = vperm.xlu0 %1475, %v1458
      %v1477 = vpop.permute.xlu0 %1476
      %1480 = vset.pattern.permute.xlu0 0
      %1481 = vperm.xlu0 %1480, %v1459
      %v1482 = vpop.permute.xlu0 %1481
      %1485 = vset.pattern.permute.xlu0 0
      %1486 = vperm.xlu0 %1485, %v1460
      %v1487 = vpop.permute.xlu0 %1486
      %1490 = vset.pattern.permute.xlu0 0
      %1491 = vperm.xlu0 %1490, %v1461
      %v1492 = vpop.permute.xlu0 %1491
      %1495 = vset.pattern.permute.xlu0 0
      %1496 = vperm.xlu0 %1495, %v1462
      %v1497 = vpop.permute.xlu0 %1496
      %1500 = vset.pattern.permute.xlu0 0
      %1501 = vperm.xlu0 %1500, %v1463
      %v1502 = vpop.permute.xlu0 %1501
      %1505 = vset.pattern.permute.xlu0 0
      %1506 = vperm.xlu0 %1505, %v1464
      %v1507 = vpop.permute.xlu0 %1506
      %1510 = vset.pattern.permute.xlu0 0
      %1511 = vperm.xlu0 %1510, %v1465
      %v1512 = vpop.permute.xlu0 %1511
      %1515 = vset.pattern.permute.xlu0 0
      %1516 = vperm.xlu0 %1515, %v1466
      %v1517 = vpop.permute.xlu0 %1516
      %1520 = vset.pattern.permute.xlu0 0
      %1521 = vperm.xlu0 %1520, %v1467
      %v1522 = vpop.permute.xlu0 %1521
      %1525 = vset.pattern.permute.xlu0 0
      %1526 = vperm.xlu0 %1525, %v1468
      %v1527 = vpop.permute.xlu0 %1526
      %1530 = vset.pattern.permute.xlu0 0
      %1531 = vperm.xlu0 %1530, %v1469
      %v1532 = vpop.permute.xlu0 %1531
      %1535 = vset.pattern.permute.xlu0 0
      %1536 = vperm.xlu0 %1535, %v1470
      %v1537 = vpop.permute.xlu0 %1536
      %1540 = vset.pattern.permute.xlu0 0
      %1541 = vperm.xlu0 %1540, %v1471
      %v1542 = vpop.permute.xlu0 %1541
      %1545 = vset.pattern.permute.xlu0 0
      %1546 = vperm.xlu0 %1545, %v1472
      %v1547 = vpop.permute.xlu0 %1546
      %1550 = vset.pattern.permute.xlu0 0
      %1551 = vperm.xlu0 %1550, %v1473
      %v1552 = vpop.permute.xlu0 %1551
      %v1554 = vmul.f32 %v1477, %v328
      %v1555 = vmul.f32 %v1477, %v329
      %v1556 = vmul.f32 %v1482, %v328
      %v1557 = vmul.f32 %v1482, %v329
      %v1558 = vmul.f32 %v1487, %v328
      %v1559 = vmul.f32 %v1487, %v329
      %v1560 = vmul.f32 %v1492, %v328
      %v1561 = vmul.f32 %v1492, %v329
      %v1562 = vmul.f32 %v1497, %v328
      %v1563 = vmul.f32 %v1497, %v329
      %v1564 = vmul.f32 %v1502, %v328
      %v1565 = vmul.f32 %v1502, %v329
      %v1566 = vmul.f32 %v1507, %v328
      %v1567 = vmul.f32 %v1507, %v329
      %v1568 = vmul.f32 %v1512, %v328
      %v1569 = vmul.f32 %v1512, %v329
      %v1570 = vmul.f32 %v1517, %v328
      %v1571 = vmul.f32 %v1517, %v329
      %v1572 = vmul.f32 %v1522, %v328
      %v1573 = vmul.f32 %v1522, %v329
      %v1574 = vmul.f32 %v1527, %v328
      %v1575 = vmul.f32 %v1527, %v329
      %v1576 = vmul.f32 %v1532, %v328
      %v1577 = vmul.f32 %v1532, %v329
      %v1578 = vmul.f32 %v1537, %v328
      %v1579 = vmul.f32 %v1537, %v329
      %v1580 = vmul.f32 %v1542, %v328
      %v1581 = vmul.f32 %v1542, %v329
      %v1582 = vmul.f32 %v1547, %v328
      %v1583 = vmul.f32 %v1547, %v329
      %v1584 = vmul.f32 %v1552, %v328
      %v1585 = vmul.f32 %v1552, %v329
      %1586 = vset.pattern.permute.xlu0 1
      %1587 = vperm.xlu0 %1586, %v1458
      %v1588 = vpop.permute.xlu0 %1587
      %1590 = vset.pattern.permute.xlu0 1
      %1591 = vperm.xlu0 %1590, %v1459
      %v1592 = vpop.permute.xlu0 %1591
      %1594 = vset.pattern.permute.xlu0 1
      %1595 = vperm.xlu0 %1594, %v1460
      %v1596 = vpop.permute.xlu0 %1595
      %1598 = vset.pattern.permute.xlu0 1
      %1599 = vperm.xlu0 %1598, %v1461
      %v1600 = vpop.permute.xlu0 %1599
      %1602 = vset.pattern.permute.xlu0 1
      %1603 = vperm.xlu0 %1602, %v1462
      %v1604 = vpop.permute.xlu0 %1603
      %1606 = vset.pattern.permute.xlu0 1
      %1607 = vperm.xlu0 %1606, %v1463
      %v1608 = vpop.permute.xlu0 %1607
      %1610 = vset.pattern.permute.xlu0 1
      %1611 = vperm.xlu0 %1610, %v1464
      %v1612 = vpop.permute.xlu0 %1611
      %1614 = vset.pattern.permute.xlu0 1
      %1615 = vperm.xlu0 %1614, %v1465
      %v1616 = vpop.permute.xlu0 %1615
      %1618 = vset.pattern.permute.xlu0 1
      %1619 = vperm.xlu0 %1618, %v1466
      %v1620 = vpop.permute.xlu0 %1619
      %1622 = vset.pattern.permute.xlu0 1
      %1623 = vperm.xlu0 %1622, %v1467
      %v1624 = vpop.permute.xlu0 %1623
      %1626 = vset.pattern.permute.xlu0 1
      %1627 = vperm.xlu0 %1626, %v1468
      %v1628 = vpop.permute.xlu0 %1627
      %1630 = vset.pattern.permute.xlu0 1
      %1631 = vperm.xlu0 %1630, %v1469
      %v1632 = vpop.permute.xlu0 %1631
      %1634 = vset.pattern.permute.xlu0 1
      %1635 = vperm.xlu0 %1634, %v1470
      %v1636 = vpop.permute.xlu0 %1635
      %1638 = vset.pattern.permute.xlu0 1
      %1639 = vperm.xlu0 %1638, %v1471
      %v1640 = vpop.permute.xlu0 %1639
      %1642 = vset.pattern.permute.xlu0 1
      %1643 = vperm.xlu0 %1642, %v1472
      %v1644 = vpop.permute.xlu0 %1643
      %1646 = vset.pattern.permute.xlu0 1
      %1647 = vperm.xlu0 %1646, %v1473
      %v1648 = vpop.permute.xlu0 %1647
      %v1650 = vmul.f32 %v1588, %v430
      %v1651 = vmul.f32 %v1588, %v431
      %v1652 = vmul.f32 %v1592, %v430
      %v1653 = vmul.f32 %v1592, %v431
      %v1654 = vmul.f32 %v1596, %v430
      %v1655 = vmul.f32 %v1596, %v431
      %v1656 = vmul.f32 %v1600, %v430
      %v1657 = vmul.f32 %v1600, %v431
      %v1658 = vmul.f32 %v1604, %v430
      %v1659 = vmul.f32 %v1604, %v431
      %v1660 = vmul.f32 %v1608, %v430
      %v1661 = vmul.f32 %v1608, %v431
      %v1662 = vmul.f32 %v1612, %v430
      %v1663 = vmul.f32 %v1612, %v431
      %v1664 = vmul.f32 %v1616, %v430
      %v1665 = vmul.f32 %v1616, %v431
      %v1666 = vmul.f32 %v1620, %v430
      %v1667 = vmul.f32 %v1620, %v431
      %v1668 = vmul.f32 %v1624, %v430
      %v1669 = vmul.f32 %v1624, %v431
      %v1670 = vmul.f32 %v1628, %v430
      %v1671 = vmul.f32 %v1628, %v431
      %v1672 = vmul.f32 %v1632, %v430
      %v1673 = vmul.f32 %v1632, %v431
      %v1674 = vmul.f32 %v1636, %v430
      %v1675 = vmul.f32 %v1636, %v431
      %v1676 = vmul.f32 %v1640, %v430
      %v1677 = vmul.f32 %v1640, %v431
      %v1678 = vmul.f32 %v1644, %v430
      %v1679 = vmul.f32 %v1644, %v431
      %v1680 = vmul.f32 %v1648, %v430
      %v1681 = vmul.f32 %v1648, %v431
      %v1682 = vadd.f32 %v1554, %v1650
      %v1683 = vadd.f32 %v1555, %v1651
      %v1684 = vadd.f32 %v1556, %v1652
      %v1685 = vadd.f32 %v1557, %v1653
      %v1686 = vadd.f32 %v1558, %v1654
      %v1687 = vadd.f32 %v1559, %v1655
      %v1688 = vadd.f32 %v1560, %v1656
      %v1689 = vadd.f32 %v1561, %v1657
      %v1690 = vadd.f32 %v1562, %v1658
      %v1691 = vadd.f32 %v1563, %v1659
      %v1692 = vadd.f32 %v1564, %v1660
      %v1693 = vadd.f32 %v1565, %v1661
      %v1694 = vadd.f32 %v1566, %v1662
      %v1695 = vadd.f32 %v1567, %v1663
      %v1696 = vadd.f32 %v1568, %v1664
      %v1697 = vadd.f32 %v1569, %v1665
      %v1698 = vadd.f32 %v1570, %v1666
      %v1699 = vadd.f32 %v1571, %v1667
      %v1700 = vadd.f32 %v1572, %v1668
      %v1701 = vadd.f32 %v1573, %v1669
      %v1702 = vadd.f32 %v1574, %v1670
      %v1703 = vadd.f32 %v1575, %v1671
      %v1704 = vadd.f32 %v1576, %v1672
      %v1705 = vadd.f32 %v1577, %v1673
      %v1706 = vadd.f32 %v1578, %v1674
      %v1707 = vadd.f32 %v1579, %v1675
      %v1708 = vadd.f32 %v1580, %v1676
      %v1709 = vadd.f32 %v1581, %v1677
      %v1710 = vadd.f32 %v1582, %v1678
      %v1711 = vadd.f32 %v1583, %v1679
      %v1712 = vadd.f32 %v1584, %v1680
      %v1713 = vadd.f32 %v1585, %v1681
      %1714 = vset.pattern.permute.xlu0 2
      %1715 = vperm.xlu0 %1714, %v1458
      %v1716 = vpop.permute.xlu0 %1715
      %1718 = vset.pattern.permute.xlu0 2
      %1719 = vperm.xlu0 %1718, %v1459
      %v1720 = vpop.permute.xlu0 %1719
      %1722 = vset.pattern.permute.xlu0 2
      %1723 = vperm.xlu0 %1722, %v1460
      %v1724 = vpop.permute.xlu0 %1723
      %1726 = vset.pattern.permute.xlu0 2
      %1727 = vperm.xlu0 %1726, %v1461
      %v1728 = vpop.permute.xlu0 %1727
      %1730 = vset.pattern.permute.xlu0 2
      %1731 = vperm.xlu0 %1730, %v1462
      %v1732 = vpop.permute.xlu0 %1731
      %1734 = vset.pattern.permute.xlu0 2
      %1735 = vperm.xlu0 %1734, %v1463
      %v1736 = vpop.permute.xlu0 %1735
      %1738 = vset.pattern.permute.xlu0 2
      %1739 = vperm.xlu0 %1738, %v1464
      %v1740 = vpop.permute.xlu0 %1739
      %1742 = vset.pattern.permute.xlu0 2
      %1743 = vperm.xlu0 %1742, %v1465
      %v1744 = vpop.permute.xlu0 %1743
      %1746 = vset.pattern.permute.xlu0 2
      %1747 = vperm.xlu0 %1746, %v1466
      %v1748 = vpop.permute.xlu0 %1747
      %1750 = vset.pattern.permute.xlu0 2
      %1751 = vperm.xlu0 %1750, %v1467
      %v1752 = vpop.permute.xlu0 %1751
      %1754 = vset.pattern.permute.xlu0 2
      %1755 = vperm.xlu0 %1754, %v1468
      %v1756 = vpop.permute.xlu0 %1755
      %1758 = vset.pattern.permute.xlu0 2
      %1759 = vperm.xlu0 %1758, %v1469
      %v1760 = vpop.permute.xlu0 %1759
      %1762 = vset.pattern.permute.xlu0 2
      %1763 = vperm.xlu0 %1762, %v1470
      %v1764 = vpop.permute.xlu0 %1763
      %1766 = vset.pattern.permute.xlu0 2
      %1767 = vperm.xlu0 %1766, %v1471
      %v1768 = vpop.permute.xlu0 %1767
      %1770 = vset.pattern.permute.xlu0 2
      %1771 = vperm.xlu0 %1770, %v1472
      %v1772 = vpop.permute.xlu0 %1771
      %1774 = vset.pattern.permute.xlu0 2
      %1775 = vperm.xlu0 %1774, %v1473
      %v1776 = vpop.permute.xlu0 %1775
      %v1778 = vmul.f32 %v1716, %v564
      %v1779 = vmul.f32 %v1716, %v565
      %v1780 = vmul.f32 %v1720, %v564
      %v1781 = vmul.f32 %v1720, %v565
      %v1782 = vmul.f32 %v1724, %v564
      %v1783 = vmul.f32 %v1724, %v565
      %v1784 = vmul.f32 %v1728, %v564
      %v1785 = vmul.f32 %v1728, %v565
      %v1786 = vmul.f32 %v1732, %v564
      %v1787 = vmul.f32 %v1732, %v565
      %v1788 = vmul.f32 %v1736, %v564
      %v1789 = vmul.f32 %v1736, %v565
      %v1790 = vmul.f32 %v1740, %v564
      %v1791 = vmul.f32 %v1740, %v565
      %v1792 = vmul.f32 %v1744, %v564
      %v1793 = vmul.f32 %v1744, %v565
      %v1794 = vmul.f32 %v1748, %v564
      %v1795 = vmul.f32 %v1748, %v565
      %v1796 = vmul.f32 %v1752, %v564
      %v1797 = vmul.f32 %v1752, %v565
      %v1798 = vmul.f32 %v1756, %v564
      %v1799 = vmul.f32 %v1756, %v565
      %v1800 = vmul.f32 %v1760, %v564
      %v1801 = vmul.f32 %v1760, %v565
      %v1802 = vmul.f32 %v1764, %v564
      %v1803 = vmul.f32 %v1764, %v565
      %v1804 = vmul.f32 %v1768, %v564
      %v1805 = vmul.f32 %v1768, %v565
      %v1806 = vmul.f32 %v1772, %v564
      %v1807 = vmul.f32 %v1772, %v565
      %v1808 = vmul.f32 %v1776, %v564
      %v1809 = vmul.f32 %v1776, %v565
      %v1810 = vadd.f32 %v1682, %v1778
      %v1811 = vadd.f32 %v1683, %v1779
      %v1812 = vadd.f32 %v1684, %v1780
      %v1813 = vadd.f32 %v1685, %v1781
      %v1814 = vadd.f32 %v1686, %v1782
      %v1815 = vadd.f32 %v1687, %v1783
      %v1816 = vadd.f32 %v1688, %v1784
      %v1817 = vadd.f32 %v1689, %v1785
      %v1818 = vadd.f32 %v1690, %v1786
      %v1819 = vadd.f32 %v1691, %v1787
      %v1820 = vadd.f32 %v1692, %v1788
      %v1821 = vadd.f32 %v1693, %v1789
      %v1822 = vadd.f32 %v1694, %v1790
      %v1823 = vadd.f32 %v1695, %v1791
      %v1824 = vadd.f32 %v1696, %v1792
      %v1825 = vadd.f32 %v1697, %v1793
      %v1826 = vadd.f32 %v1698, %v1794
      %v1827 = vadd.f32 %v1699, %v1795
      %v1828 = vadd.f32 %v1700, %v1796
      %v1829 = vadd.f32 %v1701, %v1797
      %v1830 = vadd.f32 %v1702, %v1798
      %v1831 = vadd.f32 %v1703, %v1799
      %v1832 = vadd.f32 %v1704, %v1800
      %v1833 = vadd.f32 %v1705, %v1801
      %v1834 = vadd.f32 %v1706, %v1802
      %v1835 = vadd.f32 %v1707, %v1803
      %v1836 = vadd.f32 %v1708, %v1804
      %v1837 = vadd.f32 %v1709, %v1805
      %v1838 = vadd.f32 %v1710, %v1806
      %v1839 = vadd.f32 %v1711, %v1807
      %v1840 = vadd.f32 %v1712, %v1808
      %v1841 = vadd.f32 %v1713, %v1809
      %1842 = vset.pattern.permute.xlu0 3
      %1843 = vperm.xlu0 %1842, %v1458
      %v1844 = vpop.permute.xlu0 %1843
      %1846 = vset.pattern.permute.xlu0 3
      %1847 = vperm.xlu0 %1846, %v1459
      %v1848 = vpop.permute.xlu0 %1847
      %1850 = vset.pattern.permute.xlu0 3
      %1851 = vperm.xlu0 %1850, %v1460
      %v1852 = vpop.permute.xlu0 %1851
      %1854 = vset.pattern.permute.xlu0 3
      %1855 = vperm.xlu0 %1854, %v1461
      %v1856 = vpop.permute.xlu0 %1855
      %1858 = vset.pattern.permute.xlu0 3
      %1859 = vperm.xlu0 %1858, %v1462
      %v1860 = vpop.permute.xlu0 %1859
      %1862 = vset.pattern.permute.xlu0 3
      %1863 = vperm.xlu0 %1862, %v1463
      %v1864 = vpop.permute.xlu0 %1863
      %1866 = vset.pattern.permute.xlu0 3
      %1867 = vperm.xlu0 %1866, %v1464
      %v1868 = vpop.permute.xlu0 %1867
      %1870 = vset.pattern.permute.xlu0 3
      %1871 = vperm.xlu0 %1870, %v1465
      %v1872 = vpop.permute.xlu0 %1871
      %1874 = vset.pattern.permute.xlu0 3
      %1875 = vperm.xlu0 %1874, %v1466
      %v1876 = vpop.permute.xlu0 %1875
      %1878 = vset.pattern.permute.xlu0 3
      %1879 = vperm.xlu0 %1878, %v1467
      %v1880 = vpop.permute.xlu0 %1879
      %1882 = vset.pattern.permute.xlu0 3
      %1883 = vperm.xlu0 %1882, %v1468
      %v1884 = vpop.permute.xlu0 %1883
      %1886 = vset.pattern.permute.xlu0 3
      %1887 = vperm.xlu0 %1886, %v1469
      %v1888 = vpop.permute.xlu0 %1887
      %1890 = vset.pattern.permute.xlu0 3
      %1891 = vperm.xlu0 %1890, %v1470
      %v1892 = vpop.permute.xlu0 %1891
      %1894 = vset.pattern.permute.xlu0 3
      %1895 = vperm.xlu0 %1894, %v1471
      %v1896 = vpop.permute.xlu0 %1895
      %1898 = vset.pattern.permute.xlu0 3
      %1899 = vperm.xlu0 %1898, %v1472
      %v1900 = vpop.permute.xlu0 %1899
      %1902 = vset.pattern.permute.xlu0 3
      %1903 = vperm.xlu0 %1902, %v1473
      %v1904 = vpop.permute.xlu0 %1903
      %v1906 = vmul.f32 %v1844, %v698
      %v1907 = vmul.f32 %v1844, %v699
      %v1908 = vmul.f32 %v1848, %v698
      %v1909 = vmul.f32 %v1848, %v699
      %v1910 = vmul.f32 %v1852, %v698
      %v1911 = vmul.f32 %v1852, %v699
      %v1912 = vmul.f32 %v1856, %v698
      %v1913 = vmul.f32 %v1856, %v699
      %v1914 = vmul.f32 %v1860, %v698
      %v1915 = vmul.f32 %v1860, %v699
      %v1916 = vmul.f32 %v1864, %v698
      %v1917 = vmul.f32 %v1864, %v699
      %v1918 = vmul.f32 %v1868, %v698
      %v1919 = vmul.f32 %v1868, %v699
      %v1920 = vmul.f32 %v1872, %v698
      %v1921 = vmul.f32 %v1872, %v699
      %v1922 = vmul.f32 %v1876, %v698
      %v1923 = vmul.f32 %v1876, %v699
      %v1924 = vmul.f32 %v1880, %v698
      %v1925 = vmul.f32 %v1880, %v699
      %v1926 = vmul.f32 %v1884, %v698
      %v1927 = vmul.f32 %v1884, %v699
      %v1928 = vmul.f32 %v1888, %v698
      %v1929 = vmul.f32 %v1888, %v699
      %v1930 = vmul.f32 %v1892, %v698
      %v1931 = vmul.f32 %v1892, %v699
      %v1932 = vmul.f32 %v1896, %v698
      %v1933 = vmul.f32 %v1896, %v699
      %v1934 = vmul.f32 %v1900, %v698
      %v1935 = vmul.f32 %v1900, %v699
      %v1936 = vmul.f32 %v1904, %v698
      %v1937 = vmul.f32 %v1904, %v699
      %v1938 = vadd.f32 %v1810, %v1906
      %v1939 = vadd.f32 %v1811, %v1907
      %v1940 = vadd.f32 %v1812, %v1908
      %v1941 = vadd.f32 %v1813, %v1909
      %v1942 = vadd.f32 %v1814, %v1910
      %v1943 = vadd.f32 %v1815, %v1911
      %v1944 = vadd.f32 %v1816, %v1912
      %v1945 = vadd.f32 %v1817, %v1913
      %v1946 = vadd.f32 %v1818, %v1914
      %v1947 = vadd.f32 %v1819, %v1915
      %v1948 = vadd.f32 %v1820, %v1916
      %v1949 = vadd.f32 %v1821, %v1917
      %v1950 = vadd.f32 %v1822, %v1918
      %v1951 = vadd.f32 %v1823, %v1919
      %v1952 = vadd.f32 %v1824, %v1920
      %v1953 = vadd.f32 %v1825, %v1921
      %v1954 = vadd.f32 %v1826, %v1922
      %v1955 = vadd.f32 %v1827, %v1923
      %v1956 = vadd.f32 %v1828, %v1924
      %v1957 = vadd.f32 %v1829, %v1925
      %v1958 = vadd.f32 %v1830, %v1926
      %v1959 = vadd.f32 %v1831, %v1927
      %v1960 = vadd.f32 %v1832, %v1928
      %v1961 = vadd.f32 %v1833, %v1929
      %v1962 = vadd.f32 %v1834, %v1930
      %v1963 = vadd.f32 %v1835, %v1931
      %v1964 = vadd.f32 %v1836, %v1932
      %v1965 = vadd.f32 %v1837, %v1933
      %v1966 = vadd.f32 %v1838, %v1934
      %v1967 = vadd.f32 %v1839, %v1935
      %v1968 = vadd.f32 %v1840, %v1936
      %v1969 = vadd.f32 %v1841, %v1937
      %v1970 = vmax.f32 %v1938, 0.0
      %v1971 = vmax.f32 %v1939, 0.0
      %v1972 = vmax.f32 %v1940, 0.0
      %v1973 = vmax.f32 %v1941, 0.0
      %v1974 = vmax.f32 %v1942, 0.0
      %v1975 = vmax.f32 %v1943, 0.0
      %v1976 = vmax.f32 %v1944, 0.0
      %v1977 = vmax.f32 %v1945, 0.0
      %v1978 = vmax.f32 %v1946, 0.0
      %v1979 = vmax.f32 %v1947, 0.0
      %v1980 = vmax.f32 %v1948, 0.0
      %v1981 = vmax.f32 %v1949, 0.0
      %v1982 = vmax.f32 %v1950, 0.0
      %v1983 = vmax.f32 %v1951, 0.0
      %v1984 = vmax.f32 %v1952, 0.0
      %v1985 = vmax.f32 %v1953, 0.0
      %v1986 = vmax.f32 %v1954, 0.0
      %v1987 = vmax.f32 %v1955, 0.0
      %v1988 = vmax.f32 %v1956, 0.0
      %v1989 = vmax.f32 %v1957, 0.0
      %v1990 = vmax.f32 %v1958, 0.0
      %v1991 = vmax.f32 %v1959, 0.0
      %v1992 = vmax.f32 %v1960, 0.0
      %v1993 = vmax.f32 %v1961, 0.0
      %v1994 = vmax.f32 %v1962, 0.0
      %v1995 = vmax.f32 %v1963, 0.0
      %v1996 = vmax.f32 %v1964, 0.0
      %v1997 = vmax.f32 %v1965, 0.0
      %v1998 = vmax.f32 %v1966, 0.0
      %v1999 = vmax.f32 %v1967, 0.0
      %v2000 = vmax.f32 %v1968, 0.0
      %v2001 = vmax.f32 %v1969, 0.0
      %v2002 = vld [vmem:[%s2 + $0x2] sm:$0x1]
      %v2003 = vpack.c.bf16 %v1972, %v1970
      %v2004 = vpack.c.bf16 %v1973, %v1971
      %v2005 = vpack.c.bf16 %v1976, %v1974
      %v2006 = vpack.c.bf16 %v1977, %v1975
      %v2007 = vpack.c.bf16 %v1980, %v1978
      %v2008 = vpack.c.bf16 %v1981, %v1979
      %v2009 = vpack.c.bf16 %v1984, %v1982
      %v2010 = vpack.c.bf16 %v1985, %v1983
      %v2011 = vpack.c.bf16 %v1988, %v1986
      %v2012 = vpack.c.bf16 %v1989, %v1987
      %v2013 = vpack.c.bf16 %v1992, %v1990
      %v2014 = vpack.c.bf16 %v1993, %v1991
      %v2015 = vpack.c.bf16 %v1996, %v1994
      %v2016 = vpack.c.bf16 %v1997, %v1995
      %v2017 = vpack.c.bf16 %v2000, %v1998
      %v2018 = vpack.c.bf16 %v2001, %v1999
      %2019 = vmatpush.bf16.msra.mxu0 %v2017
      %2020 = vmatpush.bf16.msra.mxu0 %v2015
      %2021 = vmatpush.bf16.msra.mxu0 %v2013
      %2022 = vmatpush.bf16.msra.mxu0 %v2011
      %2023 = vmatpush.bf16.msra.mxu0 %v2009
      %2024 = vmatpush.bf16.msra.mxu0 %v2007
      %2025 = vmatpush.bf16.msra.mxu0 %v2005
      %2026 = vmatpush.bf16.msra.mxu0 %v2003
      %2027 = vmatmul.bf16.gmra.mxu0 %v2002
      %v2028 = vpop.f32.mrf.mxu0
      %v2029 = vadd.f32 0.0, %v2028
      %v2030 = vpop.f32.mrf.mxu0
      %2031 = vdwg.mxu0
      %2032 = vmatpush.bf16.msra.mxu0 %v2018
      %2033 = vmatpush.bf16.msra.mxu0 %v2016
      %2034 = vmatpush.bf16.msra.mxu0 %v2014
      %2035 = vmatpush.bf16.msra.mxu0 %v2012
      %2036 = vmatpush.bf16.msra.mxu0 %v2010
      %2037 = vmatpush.bf16.msra.mxu0 %v2008
      %2038 = vmatpush.bf16.msra.mxu0 %v2006
      %2039 = vmatpush.bf16.msra.mxu0 %v2004
      %2040 = vmatmul.bf16.gmra.mxu0 %v2002
      %v2041 = vpop.f32.mrf.mxu0
      %v2042 = vadd.f32 0.0, %v2041
      %v2043 = vpop.f32.mrf.mxu0
      %2044 = vdwg.mxu0
      %v2045 = vadd.f32 %v1426, %v2029
      %v2046 = vadd.f32 %v1439, %v2042
      %v2047 = vld [vmem:[%s1 + $0xc0] sm:$0xf]
      %v2048 = vld [vmem:[%s1 + $0xc4] sm:$0xf]
      %v2049 = vld [vmem:[%s1 + $0xc8] sm:$0xf]
      %v2050 = vld [vmem:[%s1 + $0xcc] sm:$0xf]
      %v2051 = vld [vmem:[%s1 + $0xd0] sm:$0xf]
      %v2052 = vld [vmem:[%s1 + $0xd4] sm:$0xf]
      %v2053 = vld [vmem:[%s1 + $0xd8] sm:$0xf]
      %v2054 = vld [vmem:[%s1 + $0xdc] sm:$0xf]
      %v2055 = vld [vmem:[%s1 + $0xe0] sm:$0xf]
      %v2056 = vld [vmem:[%s1 + $0xe4] sm:$0xf]
      %v2057 = vld [vmem:[%s1 + $0xe8] sm:$0xf]
      %v2058 = vld [vmem:[%s1 + $0xec] sm:$0xf]
      %v2059 = vld [vmem:[%s1 + $0xf0] sm:$0xf]
      %v2060 = vld [vmem:[%s1 + $0xf4] sm:$0xf]
      %v2061 = vld [vmem:[%s1 + $0xf8] sm:$0xf]
      %v2062 = vld [vmem:[%s1 + $0xfc] sm:$0xf]
      %v2063 = vunpack.c.l.bf16 %v2047
      %v2064 = vunpack.c.l.bf16 %v2048
      %v2065 = vunpack.c.l.bf16 %v2049
      %v2066 = vunpack.c.l.bf16 %v2050
      %v2067 = vunpack.c.l.bf16 %v2051
      %v2068 = vunpack.c.l.bf16 %v2052
      %v2069 = vunpack.c.l.bf16 %v2053
      %v2070 = vunpack.c.l.bf16 %v2054
      %v2071 = vunpack.c.l.bf16 %v2055
      %v2072 = vunpack.c.l.bf16 %v2056
      %v2073 = vunpack.c.l.bf16 %v2057
      %v2074 = vunpack.c.l.bf16 %v2058
      %v2075 = vunpack.c.l.bf16 %v2059
      %v2076 = vunpack.c.l.bf16 %v2060
      %v2077 = vunpack.c.l.bf16 %v2061
      %v2078 = vunpack.c.l.bf16 %v2062
      %2080 = vset.pattern.permute.xlu0 0
      %2081 = vperm.xlu0 %2080, %v2063
      %v2082 = vpop.permute.xlu0 %2081
      %2085 = vset.pattern.permute.xlu0 0
      %2086 = vperm.xlu0 %2085, %v2064
      %v2087 = vpop.permute.xlu0 %2086
      %2090 = vset.pattern.permute.xlu0 0
      %2091 = vperm.xlu0 %2090, %v2065
      %v2092 = vpop.permute.xlu0 %2091
      %2095 = vset.pattern.permute.xlu0 0
      %2096 = vperm.xlu0 %2095, %v2066
      %v2097 = vpop.permute.xlu0 %2096
      %2100 = vset.pattern.permute.xlu0 0
      %2101 = vperm.xlu0 %2100, %v2067
      %v2102 = vpop.permute.xlu0 %2101
      %2105 = vset.pattern.permute.xlu0 0
      %2106 = vperm.xlu0 %2105, %v2068
      %v2107 = vpop.permute.xlu0 %2106
      %2110 = vset.pattern.permute.xlu0 0
      %2111 = vperm.xlu0 %2110, %v2069
      %v2112 = vpop.permute.xlu0 %2111
      %2115 = vset.pattern.permute.xlu0 0
      %2116 = vperm.xlu0 %2115, %v2070
      %v2117 = vpop.permute.xlu0 %2116
      %2120 = vset.pattern.permute.xlu0 0
      %2121 = vperm.xlu0 %2120, %v2071
      %v2122 = vpop.permute.xlu0 %2121
      %2125 = vset.pattern.permute.xlu0 0
      %2126 = vperm.xlu0 %2125, %v2072
      %v2127 = vpop.permute.xlu0 %2126
      %2130 = vset.pattern.permute.xlu0 0
      %2131 = vperm.xlu0 %2130, %v2073
      %v2132 = vpop.permute.xlu0 %2131
      %2135 = vset.pattern.permute.xlu0 0
      %2136 = vperm.xlu0 %2135, %v2074
      %v2137 = vpop.permute.xlu0 %2136
      %2140 = vset.pattern.permute.xlu0 0
      %2141 = vperm.xlu0 %2140, %v2075
      %v2142 = vpop.permute.xlu0 %2141
      %2145 = vset.pattern.permute.xlu0 0
      %2146 = vperm.xlu0 %2145, %v2076
      %v2147 = vpop.permute.xlu0 %2146
      %2150 = vset.pattern.permute.xlu0 0
      %2151 = vperm.xlu0 %2150, %v2077
      %v2152 = vpop.permute.xlu0 %2151
      %2155 = vset.pattern.permute.xlu0 0
      %2156 = vperm.xlu0 %2155, %v2078
      %v2157 = vpop.permute.xlu0 %2156
      %v2159 = vmul.f32 %v2082, %v328
      %v2160 = vmul.f32 %v2082, %v329
      %v2161 = vmul.f32 %v2087, %v328
      %v2162 = vmul.f32 %v2087, %v329
      %v2163 = vmul.f32 %v2092, %v328
      %v2164 = vmul.f32 %v2092, %v329
      %v2165 = vmul.f32 %v2097, %v328
      %v2166 = vmul.f32 %v2097, %v329
      %v2167 = vmul.f32 %v2102, %v328
      %v2168 = vmul.f32 %v2102, %v329
      %v2169 = vmul.f32 %v2107, %v328
      %v2170 = vmul.f32 %v2107, %v329
      %v2171 = vmul.f32 %v2112, %v328
      %v2172 = vmul.f32 %v2112, %v329
      %v2173 = vmul.f32 %v2117, %v328
      %v2174 = vmul.f32 %v2117, %v329
      %v2175 = vmul.f32 %v2122, %v328
      %v2176 = vmul.f32 %v2122, %v329
      %v2177 = vmul.f32 %v2127, %v328
      %v2178 = vmul.f32 %v2127, %v329
      %v2179 = vmul.f32 %v2132, %v328
      %v2180 = vmul.f32 %v2132, %v329
      %v2181 = vmul.f32 %v2137, %v328
      %v2182 = vmul.f32 %v2137, %v329
      %v2183 = vmul.f32 %v2142, %v328
      %v2184 = vmul.f32 %v2142, %v329
      %v2185 = vmul.f32 %v2147, %v328
      %v2186 = vmul.f32 %v2147, %v329
      %v2187 = vmul.f32 %v2152, %v328
      %v2188 = vmul.f32 %v2152, %v329
      %v2189 = vmul.f32 %v2157, %v328
      %v2190 = vmul.f32 %v2157, %v329
      %2191 = vset.pattern.permute.xlu0 1
      %2192 = vperm.xlu0 %2191, %v2063
      %v2193 = vpop.permute.xlu0 %2192
      %2195 = vset.pattern.permute.xlu0 1
      %2196 = vperm.xlu0 %2195, %v2064
      %v2197 = vpop.permute.xlu0 %2196
      %2199 = vset.pattern.permute.xlu0 1
      %2200 = vperm.xlu0 %2199, %v2065
      %v2201 = vpop.permute.xlu0 %2200
      %2203 = vset.pattern.permute.xlu0 1
      %2204 = vperm.xlu0 %2203, %v2066
      %v2205 = vpop.permute.xlu0 %2204
      %2207 = vset.pattern.permute.xlu0 1
      %2208 = vperm.xlu0 %2207, %v2067
      %v2209 = vpop.permute.xlu0 %2208
      %2211 = vset.pattern.permute.xlu0 1
      %2212 = vperm.xlu0 %2211, %v2068
      %v2213 = vpop.permute.xlu0 %2212
      %2215 = vset.pattern.permute.xlu0 1
      %2216 = vperm.xlu0 %2215, %v2069
      %v2217 = vpop.permute.xlu0 %2216
      %2219 = vset.pattern.permute.xlu0 1
      %2220 = vperm.xlu0 %2219, %v2070
      %v2221 = vpop.permute.xlu0 %2220
      %2223 = vset.pattern.permute.xlu0 1
      %2224 = vperm.xlu0 %2223, %v2071
      %v2225 = vpop.permute.xlu0 %2224
      %2227 = vset.pattern.permute.xlu0 1
      %2228 = vperm.xlu0 %2227, %v2072
      %v2229 = vpop.permute.xlu0 %2228
      %2231 = vset.pattern.permute.xlu0 1
      %2232 = vperm.xlu0 %2231, %v2073
      %v2233 = vpop.permute.xlu0 %2232
      %2235 = vset.pattern.permute.xlu0 1
      %2236 = vperm.xlu0 %2235, %v2074
      %v2237 = vpop.permute.xlu0 %2236
      %2239 = vset.pattern.permute.xlu0 1
      %2240 = vperm.xlu0 %2239, %v2075
      %v2241 = vpop.permute.xlu0 %2240
      %2243 = vset.pattern.permute.xlu0 1
      %2244 = vperm.xlu0 %2243, %v2076
      %v2245 = vpop.permute.xlu0 %2244
      %2247 = vset.pattern.permute.xlu0 1
      %2248 = vperm.xlu0 %2247, %v2077
      %v2249 = vpop.permute.xlu0 %2248
      %2251 = vset.pattern.permute.xlu0 1
      %2252 = vperm.xlu0 %2251, %v2078
      %v2253 = vpop.permute.xlu0 %2252
      %v2255 = vmul.f32 %v2193, %v430
      %v2256 = vmul.f32 %v2193, %v431
      %v2257 = vmul.f32 %v2197, %v430
      %v2258 = vmul.f32 %v2197, %v431
      %v2259 = vmul.f32 %v2201, %v430
      %v2260 = vmul.f32 %v2201, %v431
      %v2261 = vmul.f32 %v2205, %v430
      %v2262 = vmul.f32 %v2205, %v431
      %v2263 = vmul.f32 %v2209, %v430
      %v2264 = vmul.f32 %v2209, %v431
      %v2265 = vmul.f32 %v2213, %v430
      %v2266 = vmul.f32 %v2213, %v431
      %v2267 = vmul.f32 %v2217, %v430
      %v2268 = vmul.f32 %v2217, %v431
      %v2269 = vmul.f32 %v2221, %v430
      %v2270 = vmul.f32 %v2221, %v431
      %v2271 = vmul.f32 %v2225, %v430
      %v2272 = vmul.f32 %v2225, %v431
      %v2273 = vmul.f32 %v2229, %v430
      %v2274 = vmul.f32 %v2229, %v431
      %v2275 = vmul.f32 %v2233, %v430
      %v2276 = vmul.f32 %v2233, %v431
      %v2277 = vmul.f32 %v2237, %v430
      %v2278 = vmul.f32 %v2237, %v431
      %v2279 = vmul.f32 %v2241, %v430
      %v2280 = vmul.f32 %v2241, %v431
      %v2281 = vmul.f32 %v2245, %v430
      %v2282 = vmul.f32 %v2245, %v431
      %v2283 = vmul.f32 %v2249, %v430
      %v2284 = vmul.f32 %v2249, %v431
      %v2285 = vmul.f32 %v2253, %v430
      %v2286 = vmul.f32 %v2253, %v431
      %v2287 = vadd.f32 %v2159, %v2255
      %v2288 = vadd.f32 %v2160, %v2256
      %v2289 = vadd.f32 %v2161, %v2257
      %v2290 = vadd.f32 %v2162, %v2258
      %v2291 = vadd.f32 %v2163, %v2259
      %v2292 = vadd.f32 %v2164, %v2260
      %v2293 = vadd.f32 %v2165, %v2261
      %v2294 = vadd.f32 %v2166, %v2262
      %v2295 = vadd.f32 %v2167, %v2263
      %v2296 = vadd.f32 %v2168, %v2264
      %v2297 = vadd.f32 %v2169, %v2265
      %v2298 = vadd.f32 %v2170, %v2266
      %v2299 = vadd.f32 %v2171, %v2267
      %v2300 = vadd.f32 %v2172, %v2268
      %v2301 = vadd.f32 %v2173, %v2269
      %v2302 = vadd.f32 %v2174, %v2270
      %v2303 = vadd.f32 %v2175, %v2271
      %v2304 = vadd.f32 %v2176, %v2272
      %v2305 = vadd.f32 %v2177, %v2273
      %v2306 = vadd.f32 %v2178, %v2274
      %v2307 = vadd.f32 %v2179, %v2275
      %v2308 = vadd.f32 %v2180, %v2276
      %v2309 = vadd.f32 %v2181, %v2277
      %v2310 = vadd.f32 %v2182, %v2278
      %v2311 = vadd.f32 %v2183, %v2279
      %v2312 = vadd.f32 %v2184, %v2280
      %v2313 = vadd.f32 %v2185, %v2281
      %v2314 = vadd.f32 %v2186, %v2282
      %v2315 = vadd.f32 %v2187, %v2283
      %v2316 = vadd.f32 %v2188, %v2284
      %v2317 = vadd.f32 %v2189, %v2285
      %v2318 = vadd.f32 %v2190, %v2286
      %2319 = vset.pattern.permute.xlu0 2
      %2320 = vperm.xlu0 %2319, %v2063
      %v2321 = vpop.permute.xlu0 %2320
      %2323 = vset.pattern.permute.xlu0 2
      %2324 = vperm.xlu0 %2323, %v2064
      %v2325 = vpop.permute.xlu0 %2324
      %2327 = vset.pattern.permute.xlu0 2
      %2328 = vperm.xlu0 %2327, %v2065
      %v2329 = vpop.permute.xlu0 %2328
      %2331 = vset.pattern.permute.xlu0 2
      %2332 = vperm.xlu0 %2331, %v2066
      %v2333 = vpop.permute.xlu0 %2332
      %2335 = vset.pattern.permute.xlu0 2
      %2336 = vperm.xlu0 %2335, %v2067
      %v2337 = vpop.permute.xlu0 %2336
      %2339 = vset.pattern.permute.xlu0 2
      %2340 = vperm.xlu0 %2339, %v2068
      %v2341 = vpop.permute.xlu0 %2340
      %2343 = vset.pattern.permute.xlu0 2
      %2344 = vperm.xlu0 %2343, %v2069
      %v2345 = vpop.permute.xlu0 %2344
      %2347 = vset.pattern.permute.xlu0 2
      %2348 = vperm.xlu0 %2347, %v2070
      %v2349 = vpop.permute.xlu0 %2348
      %2351 = vset.pattern.permute.xlu0 2
      %2352 = vperm.xlu0 %2351, %v2071
      %v2353 = vpop.permute.xlu0 %2352
      %2355 = vset.pattern.permute.xlu0 2
      %2356 = vperm.xlu0 %2355, %v2072
      %v2357 = vpop.permute.xlu0 %2356
      %2359 = vset.pattern.permute.xlu0 2
      %2360 = vperm.xlu0 %2359, %v2073
      %v2361 = vpop.permute.xlu0 %2360
      %2363 = vset.pattern.permute.xlu0 2
      %2364 = vperm.xlu0 %2363, %v2074
      %v2365 = vpop.permute.xlu0 %2364
      %2367 = vset.pattern.permute.xlu0 2
      %2368 = vperm.xlu0 %2367, %v2075
      %v2369 = vpop.permute.xlu0 %2368
      %2371 = vset.pattern.permute.xlu0 2
      %2372 = vperm.xlu0 %2371, %v2076
      %v2373 = vpop.permute.xlu0 %2372
      %2375 = vset.pattern.permute.xlu0 2
      %2376 = vperm.xlu0 %2375, %v2077
      %v2377 = vpop.permute.xlu0 %2376
      %2379 = vset.pattern.permute.xlu0 2
      %2380 = vperm.xlu0 %2379, %v2078
      %v2381 = vpop.permute.xlu0 %2380
      %v2383 = vmul.f32 %v2321, %v564
      %v2384 = vmul.f32 %v2321, %v565
      %v2385 = vmul.f32 %v2325, %v564
      %v2386 = vmul.f32 %v2325, %v565
      %v2387 = vmul.f32 %v2329, %v564
      %v2388 = vmul.f32 %v2329, %v565
      %v2389 = vmul.f32 %v2333, %v564
      %v2390 = vmul.f32 %v2333, %v565
      %v2391 = vmul.f32 %v2337, %v564
      %v2392 = vmul.f32 %v2337, %v565
      %v2393 = vmul.f32 %v2341, %v564
      %v2394 = vmul.f32 %v2341, %v565
      %v2395 = vmul.f32 %v2345, %v564
      %v2396 = vmul.f32 %v2345, %v565
      %v2397 = vmul.f32 %v2349, %v564
      %v2398 = vmul.f32 %v2349, %v565
      %v2399 = vmul.f32 %v2353, %v564
      %v2400 = vmul.f32 %v2353, %v565
      %v2401 = vmul.f32 %v2357, %v564
      %v2402 = vmul.f32 %v2357, %v565
      %v2403 = vmul.f32 %v2361, %v564
      %v2404 = vmul.f32 %v2361, %v565
      %v2405 = vmul.f32 %v2365, %v564
      %v2406 = vmul.f32 %v2365, %v565
      %v2407 = vmul.f32 %v2369, %v564
      %v2408 = vmul.f32 %v2369, %v565
      %v2409 = vmul.f32 %v2373, %v564
      %v2410 = vmul.f32 %v2373, %v565
      %v2411 = vmul.f32 %v2377, %v564
      %v2412 = vmul.f32 %v2377, %v565
      %v2413 = vmul.f32 %v2381, %v564
      %v2414 = vmul.f32 %v2381, %v565
      %v2415 = vadd.f32 %v2287, %v2383
      %v2416 = vadd.f32 %v2288, %v2384
      %v2417 = vadd.f32 %v2289, %v2385
      %v2418 = vadd.f32 %v2290, %v2386
      %v2419 = vadd.f32 %v2291, %v2387
      %v2420 = vadd.f32 %v2292, %v2388
      %v2421 = vadd.f32 %v2293, %v2389
      %v2422 = vadd.f32 %v2294, %v2390
      %v2423 = vadd.f32 %v2295, %v2391
      %v2424 = vadd.f32 %v2296, %v2392
      %v2425 = vadd.f32 %v2297, %v2393
      %v2426 = vadd.f32 %v2298, %v2394
      %v2427 = vadd.f32 %v2299, %v2395
      %v2428 = vadd.f32 %v2300, %v2396
      %v2429 = vadd.f32 %v2301, %v2397
      %v2430 = vadd.f32 %v2302, %v2398
      %v2431 = vadd.f32 %v2303, %v2399
      %v2432 = vadd.f32 %v2304, %v2400
      %v2433 = vadd.f32 %v2305, %v2401
      %v2434 = vadd.f32 %v2306, %v2402
      %v2435 = vadd.f32 %v2307, %v2403
      %v2436 = vadd.f32 %v2308, %v2404
      %v2437 = vadd.f32 %v2309, %v2405
      %v2438 = vadd.f32 %v2310, %v2406
      %v2439 = vadd.f32 %v2311, %v2407
      %v2440 = vadd.f32 %v2312, %v2408
      %v2441 = vadd.f32 %v2313, %v2409
      %v2442 = vadd.f32 %v2314, %v2410
      %v2443 = vadd.f32 %v2315, %v2411
      %v2444 = vadd.f32 %v2316, %v2412
      %v2445 = vadd.f32 %v2317, %v2413
      %v2446 = vadd.f32 %v2318, %v2414
      %2447 = vset.pattern.permute.xlu0 3
      %2448 = vperm.xlu0 %2447, %v2063
      %v2449 = vpop.permute.xlu0 %2448
      %2451 = vset.pattern.permute.xlu0 3
      %2452 = vperm.xlu0 %2451, %v2064
      %v2453 = vpop.permute.xlu0 %2452
      %2455 = vset.pattern.permute.xlu0 3
      %2456 = vperm.xlu0 %2455, %v2065
      %v2457 = vpop.permute.xlu0 %2456
      %2459 = vset.pattern.permute.xlu0 3
      %2460 = vperm.xlu0 %2459, %v2066
      %v2461 = vpop.permute.xlu0 %2460
      %2463 = vset.pattern.permute.xlu0 3
      %2464 = vperm.xlu0 %2463, %v2067
      %v2465 = vpop.permute.xlu0 %2464
      %2467 = vset.pattern.permute.xlu0 3
      %2468 = vperm.xlu0 %2467, %v2068
      %v2469 = vpop.permute.xlu0 %2468
      %2471 = vset.pattern.permute.xlu0 3
      %2472 = vperm.xlu0 %2471, %v2069
      %v2473 = vpop.permute.xlu0 %2472
      %2475 = vset.pattern.permute.xlu0 3
      %2476 = vperm.xlu0 %2475, %v2070
      %v2477 = vpop.permute.xlu0 %2476
      %2479 = vset.pattern.permute.xlu0 3
      %2480 = vperm.xlu0 %2479, %v2071
      %v2481 = vpop.permute.xlu0 %2480
      %2483 = vset.pattern.permute.xlu0 3
      %2484 = vperm.xlu0 %2483, %v2072
      %v2485 = vpop.permute.xlu0 %2484
      %2487 = vset.pattern.permute.xlu0 3
      %2488 = vperm.xlu0 %2487, %v2073
      %v2489 = vpop.permute.xlu0 %2488
      %2491 = vset.pattern.permute.xlu0 3
      %2492 = vperm.xlu0 %2491, %v2074
      %v2493 = vpop.permute.xlu0 %2492
      %2495 = vset.pattern.permute.xlu0 3
      %2496 = vperm.xlu0 %2495, %v2075
      %v2497 = vpop.permute.xlu0 %2496
      %2499 = vset.pattern.permute.xlu0 3
      %2500 = vperm.xlu0 %2499, %v2076
      %v2501 = vpop.permute.xlu0 %2500
      %2503 = vset.pattern.permute.xlu0 3
      %2504 = vperm.xlu0 %2503, %v2077
      %v2505 = vpop.permute.xlu0 %2504
      %2507 = vset.pattern.permute.xlu0 3
      %2508 = vperm.xlu0 %2507, %v2078
      %v2509 = vpop.permute.xlu0 %2508
      %v2511 = vmul.f32 %v2449, %v698
      %v2512 = vmul.f32 %v2449, %v699
      %v2513 = vmul.f32 %v2453, %v698
      %v2514 = vmul.f32 %v2453, %v699
      %v2515 = vmul.f32 %v2457, %v698
      %v2516 = vmul.f32 %v2457, %v699
      %v2517 = vmul.f32 %v2461, %v698
      %v2518 = vmul.f32 %v2461, %v699
      %v2519 = vmul.f32 %v2465, %v698
      %v2520 = vmul.f32 %v2465, %v699
      %v2521 = vmul.f32 %v2469, %v698
      %v2522 = vmul.f32 %v2469, %v699
      %v2523 = vmul.f32 %v2473, %v698
      %v2524 = vmul.f32 %v2473, %v699
      %v2525 = vmul.f32 %v2477, %v698
      %v2526 = vmul.f32 %v2477, %v699
      %v2527 = vmul.f32 %v2481, %v698
      %v2528 = vmul.f32 %v2481, %v699
      %v2529 = vmul.f32 %v2485, %v698
      %v2530 = vmul.f32 %v2485, %v699
      %v2531 = vmul.f32 %v2489, %v698
      %v2532 = vmul.f32 %v2489, %v699
      %v2533 = vmul.f32 %v2493, %v698
      %v2534 = vmul.f32 %v2493, %v699
      %v2535 = vmul.f32 %v2497, %v698
      %v2536 = vmul.f32 %v2497, %v699
      %v2537 = vmul.f32 %v2501, %v698
      %v2538 = vmul.f32 %v2501, %v699
      %v2539 = vmul.f32 %v2505, %v698
      %v2540 = vmul.f32 %v2505, %v699
      %v2541 = vmul.f32 %v2509, %v698
      %v2542 = vmul.f32 %v2509, %v699
      %v2543 = vadd.f32 %v2415, %v2511
      %v2544 = vadd.f32 %v2416, %v2512
      %v2545 = vadd.f32 %v2417, %v2513
      %v2546 = vadd.f32 %v2418, %v2514
      %v2547 = vadd.f32 %v2419, %v2515
      %v2548 = vadd.f32 %v2420, %v2516
      %v2549 = vadd.f32 %v2421, %v2517
      %v2550 = vadd.f32 %v2422, %v2518
      %v2551 = vadd.f32 %v2423, %v2519
      %v2552 = vadd.f32 %v2424, %v2520
      %v2553 = vadd.f32 %v2425, %v2521
      %v2554 = vadd.f32 %v2426, %v2522
      %v2555 = vadd.f32 %v2427, %v2523
      %v2556 = vadd.f32 %v2428, %v2524
      %v2557 = vadd.f32 %v2429, %v2525
      %v2558 = vadd.f32 %v2430, %v2526
      %v2559 = vadd.f32 %v2431, %v2527
      %v2560 = vadd.f32 %v2432, %v2528
      %v2561 = vadd.f32 %v2433, %v2529
      %v2562 = vadd.f32 %v2434, %v2530
      %v2563 = vadd.f32 %v2435, %v2531
      %v2564 = vadd.f32 %v2436, %v2532
      %v2565 = vadd.f32 %v2437, %v2533
      %v2566 = vadd.f32 %v2438, %v2534
      %v2567 = vadd.f32 %v2439, %v2535
      %v2568 = vadd.f32 %v2440, %v2536
      %v2569 = vadd.f32 %v2441, %v2537
      %v2570 = vadd.f32 %v2442, %v2538
      %v2571 = vadd.f32 %v2443, %v2539
      %v2572 = vadd.f32 %v2444, %v2540
      %v2573 = vadd.f32 %v2445, %v2541
      %v2574 = vadd.f32 %v2446, %v2542
      %v2575 = vmax.f32 %v2543, 0.0
      %v2576 = vmax.f32 %v2544, 0.0
      %v2577 = vmax.f32 %v2545, 0.0
      %v2578 = vmax.f32 %v2546, 0.0
      %v2579 = vmax.f32 %v2547, 0.0
      %v2580 = vmax.f32 %v2548, 0.0
      %v2581 = vmax.f32 %v2549, 0.0
      %v2582 = vmax.f32 %v2550, 0.0
      %v2583 = vmax.f32 %v2551, 0.0
      %v2584 = vmax.f32 %v2552, 0.0
      %v2585 = vmax.f32 %v2553, 0.0
      %v2586 = vmax.f32 %v2554, 0.0
      %v2587 = vmax.f32 %v2555, 0.0
      %v2588 = vmax.f32 %v2556, 0.0
      %v2589 = vmax.f32 %v2557, 0.0
      %v2590 = vmax.f32 %v2558, 0.0
      %v2591 = vmax.f32 %v2559, 0.0
      %v2592 = vmax.f32 %v2560, 0.0
      %v2593 = vmax.f32 %v2561, 0.0
      %v2594 = vmax.f32 %v2562, 0.0
      %v2595 = vmax.f32 %v2563, 0.0
      %v2596 = vmax.f32 %v2564, 0.0
      %v2597 = vmax.f32 %v2565, 0.0
      %v2598 = vmax.f32 %v2566, 0.0
      %v2599 = vmax.f32 %v2567, 0.0
      %v2600 = vmax.f32 %v2568, 0.0
      %v2601 = vmax.f32 %v2569, 0.0
      %v2602 = vmax.f32 %v2570, 0.0
      %v2603 = vmax.f32 %v2571, 0.0
      %v2604 = vmax.f32 %v2572, 0.0
      %v2605 = vmax.f32 %v2573, 0.0
      %v2606 = vmax.f32 %v2574, 0.0
      %v2607 = vld [vmem:[%s2 + $0x3] sm:$0x1]
      %v2608 = vpack.c.bf16 %v2577, %v2575
      %v2609 = vpack.c.bf16 %v2578, %v2576
      %v2610 = vpack.c.bf16 %v2581, %v2579
      %v2611 = vpack.c.bf16 %v2582, %v2580
      %v2612 = vpack.c.bf16 %v2585, %v2583
      %v2613 = vpack.c.bf16 %v2586, %v2584
      %v2614 = vpack.c.bf16 %v2589, %v2587
      %v2615 = vpack.c.bf16 %v2590, %v2588
      %v2616 = vpack.c.bf16 %v2593, %v2591
      %v2617 = vpack.c.bf16 %v2594, %v2592
      %v2618 = vpack.c.bf16 %v2597, %v2595
      %v2619 = vpack.c.bf16 %v2598, %v2596
      %v2620 = vpack.c.bf16 %v2601, %v2599
      %v2621 = vpack.c.bf16 %v2602, %v2600
      %v2622 = vpack.c.bf16 %v2605, %v2603
      %v2623 = vpack.c.bf16 %v2606, %v2604
      %2624 = vmatpush.bf16.msra.mxu0 %v2622
      %2625 = vmatpush.bf16.msra.mxu0 %v2620
      %2626 = vmatpush.bf16.msra.mxu0 %v2618
      %2627 = vmatpush.bf16.msra.mxu0 %v2616
      %2628 = vmatpush.bf16.msra.mxu0 %v2614
      %2629 = vmatpush.bf16.msra.mxu0 %v2612
      %2630 = vmatpush.bf16.msra.mxu0 %v2610
      %2631 = vmatpush.bf16.msra.mxu0 %v2608
      %2632 = vmatmul.bf16.gmra.mxu0 %v2607
      %v2633 = vpop.f32.mrf.mxu0
      %v2634 = vadd.f32 0.0, %v2633
      %v2635 = vpop.f32.mrf.mxu0
      %2636 = vdwg.mxu0
      %2637 = vmatpush.bf16.msra.mxu0 %v2623
      %2638 = vmatpush.bf16.msra.mxu0 %v2621
      %2639 = vmatpush.bf16.msra.mxu0 %v2619
      %2640 = vmatpush.bf16.msra.mxu0 %v2617
      %2641 = vmatpush.bf16.msra.mxu0 %v2615
      %2642 = vmatpush.bf16.msra.mxu0 %v2613
      %2643 = vmatpush.bf16.msra.mxu0 %v2611
      %2644 = vmatpush.bf16.msra.mxu0 %v2609
      %2645 = vmatmul.bf16.gmra.mxu0 %v2607
      %v2646 = vpop.f32.mrf.mxu0
      %v2647 = vadd.f32 0.0, %v2646
      %v2648 = vpop.f32.mrf.mxu0
      %2649 = vdwg.mxu0
      %v2650 = vadd.f32 %v2045, %v2634
      %v2651 = vadd.f32 %v2046, %v2647
      %v2654 = vrot.slane %v2651, 6
      %vm2655 = vcmask 1041408
      %v2656 = vsel %vm2655, %v2650, %v2654
      %2658 = vst [vmem:[%s208] sm:$0xf] %v2656
      %s2659 = smul.u32 2, %s19
      %p2660 = scmp.lt.s32.totalorder %s18, 1
      %s2661 = scalar_select %p2660, %s18, 1
      %p2662 = scmp.lt.s32.totalorder %s2659, 1
      %s2663 = scalar_select %p2662, %s2659, 1
      %s2664 = smul.addr %s2661, 2
      %s2665 = sadd.s32 %s2663, %s2664
      %s2666 = smul.addr %s2665, 2
      %s2667 = scalar_lea.vmem %s3, %s2666
      // Predicated region
      $region33: #{image_da_forward.1} parent=31 // pred_check
        %p2668 = pneg %p116
      $region34: #{image_da_forward.1} parent=31 // pred_check_branch
        %2670 = sbr.rel (%p2668) target = $region36
      $region35: #{image_da_forward.1} parent=31 // pred_region
        %s2671 = smul.u32 2, %s19
      $region36: #{image_da_forward.1} parent=31 // pred_fallthru
        _
    $region32: #{image_da_forward.1} parent=5 // pred_fallthru
      _
    %p2672 = scmp.le.s32.totalorder 2, %s9
    // Predicated region
    $region37: #{image_da_forward.1} parent=5 // pred_check
      %p2673 = pneg %p2672
    $region38: #{image_da_forward.1} parent=5 // pred_check_branch
      %2675 = sbr.rel (%p2673) target = $region40
    $region39: #{image_da_forward.1} parent=5 // pred_region
      %s2676 = ssub.s32 %s9, 2
      // Predicated region
      $region41: #{image_da_forward.1} parent=39 // pred_check
        %p2677 = pneg %p122
      $region42: #{image_da_forward.1} parent=39 // pred_check_branch
        %2679 = sbr.rel (%p2677) target = $region44
      $region43: #{image_da_forward.1} parent=39 // pred_region
        %s2680 = smul.u32 2, %s21
        %p2681 = scmp.lt.s32.totalorder %s20, 1
        %s2682 = scalar_select %p2681, %s20, 1
        %p2683 = scmp.lt.s32.totalorder %s2680, 1
        %s2684 = scalar_select %p2683, %s2680, 1
        %s2685 = smul.addr %s2682, 2
        %s2686 = sadd.s32 %s2684, %s2685
        %s2687 = smul.addr %s2686, 2
        %s2688 = scalar_lea.vmem %s3, %s2687
      $region44: #{image_da_forward.1} parent=39 // pred_fallthru
        _
    $region40: #{image_da_forward.1} parent=5 // pred_fallthru
      _
  $region6: #{image_da_forward.1} parent=0 // loop_footer
    %s13 = sadd.s32 1, %s9
  $region7: #{image_da_forward.1} parent=0 // loop_footer_branch
    %8 = sbr.rel target = $region3
  $region8: #{image_da_forward.1} parent=0 // loop_exit
    _

</llo_original>
